<compile_context>
chip_gen: v6e
topology: v6e:2x2x1
jax: 0.10.0
libtpu: 0.0.40
codegen_flags: <defaults>
</compile_context>

<pallas_src>
import functools

import jax
import jax.numpy as jnp
from jax import lax
from jax.experimental import pallas as pl
from jax.experimental.pallas import tpu as pltpu

LANE = 128          # TPU lane width
MAX_TILE = 16384    # anchors per grid step (lane axis); sweepable
NUM_CORES = 2       # leading "parallel" grid axis (v7x has 2 TensorCores)


def _rnd_up(v, m):
    return (v + m - 1) // m * m


# --------------------------------------------------------------------------
# Pallas kernel: fused smooth-L1 + focal loss + num_pos, streamed over anchors
# --------------------------------------------------------------------------
def _focal_loss_kernel(loc_p_ref, loc_t_ref, cls_p_ref, cls_t_ref, out_ref,
                       loss_acc, pos_acc, *, alpha, n_valid, block_t, inner):
    c = pl.program_id(0)   # core split axis ("parallel")
    i = pl.program_id(1)   # anchor-chunk reduction axis ("arbitrary")

    @pl.when(i == 0)
    def _init():
        loss_acc[...] = jnp.zeros_like(loss_acc)
        pos_acc[...] = jnp.zeros_like(pos_acc)

    blk = c * inner + i          # intended (unclamped) global block index
    base = blk * block_t         # first global anchor index of this block

    @pl.when(base < n_valid)     # skip blocks that are entirely out of range
    def _compute():
        # Ragged-tail / OOB mask from the intended global anchor index.  Must be
        # a select (not *0): out-of-bounds lanes hold unspecified data.
        lane = lax.broadcasted_iota(jnp.int32, (1, block_t), 1)
        in_b = (base + lane) < n_valid                        # (1, T) bool

        tgt = cls_t_ref[...]                                  # (1, T) int32
        pos_b = jnp.logical_and(tgt > 0, in_b)                # positive anchors
        valid_b = jnp.logical_and(tgt > -1, in_b)             # non-ignored

        # ---- smooth-L1 location loss over positive anchors ----------------
        d = (loc_p_ref[...].astype(jnp.float32)
             - loc_t_ref[...].astype(jnp.float32))            # (4, T)
        ad = jnp.abs(d)
        sl1 = jnp.where(ad < 1.0, 0.5 * d * d, ad - 0.5)
        loc_rows = jnp.sum(jnp.where(pos_b, sl1, 0.0), axis=0, keepdims=True)

        # ---- focal loss (alt form); one-hot via (C,1) iota broadcast -------
        x = cls_p_ref[...].astype(jnp.float32)                # (C, T)
        cls_id = lax.broadcasted_iota(jnp.int32, (x.shape[0], 1), 0) + 1
        t_b = tgt == cls_id                                   # (C, T) bool
        x2 = x + x
        z = jnp.where(t_b, x2 + 1.0, 1.0 - x2)                # 2*x*(2t-1) + 1
        # stable log(sigmoid(z))
        log_pt = jnp.minimum(z, 0.0) - jnp.log(1.0 + jnp.exp(-jnp.abs(z)))
        w_neg = jnp.where(t_b, -0.5 * alpha, -0.5 * (1.0 - alpha))
        per = jnp.where(valid_b, w_neg * log_pt, 0.0)         # (C, T)
        cls_rows = jnp.sum(per, axis=0, keepdims=True)        # (1, T)

        loss_acc[...] += loc_rows + cls_rows
        pos_acc[...] += pos_b.astype(jnp.float32)

    @pl.when(i == pl.num_programs(1) - 1)
    def _finalize():
        # Single cross-lane reduction per core; pack partial sums lane-dense.
        loss_s = jnp.sum(loss_acc[...], axis=1, keepdims=True)   # (1, 1)
        pos_s = jnp.sum(pos_acc[...], axis=1, keepdims=True)     # (1, 1)
        li = lax.broadcasted_iota(jnp.int32, out_ref.shape, 1)
        out_ref[...] = jnp.where(li == 0, loss_s,
                                 jnp.where(li == 1, pos_s, 0.0))


# --------------------------------------------------------------------------
# Core entry point: inputs already in lane-dense (4,N)/(C,N)/(1,N) layout
# --------------------------------------------------------------------------
def focal_loss_pretransposed(loc_p, loc_t, cls_p, cls_t, *,
                             alpha=0.25, max_tile=MAX_TILE):
    """loc_p/loc_t: (4, N); cls_p: (C, N); cls_t: (1, N) int32.
    Preferred entry point when the producer can emit this layout directly."""
    C, N = cls_p.shape
    T = max(LANE, min(max_tile, _rnd_up(N, LANE)))
    nblocks = pl.cdiv(N, T)
    inner = pl.cdiv(nblocks, NUM_CORES)
    grid = (NUM_CORES, inner)

    def in_map(c, i):
        # Clamp so the DMA always targets a real block; fully-OOB "intended"
        # blocks are masked to zero contribution inside the kernel.
        return (0, jnp.minimum(c * inner + i, nblocks - 1))

    lsz = jnp.dtype(loc_p.dtype).itemsize
    psz = jnp.dtype(cls_p.dtype).itemsize
    cost = pl.CostEstimate(
        flops=N * (14 * C + 30),
        transcendentals=2 * N * C,
        bytes_accessed=N * (8 * lsz + C * psz + 4) + NUM_CORES * 8 * 128 * 4)

    parts = pl.pallas_call(
        functools.partial(_focal_loss_kernel, alpha=alpha, n_valid=N,
                          block_t=T, inner=inner),
        out_shape=jax.ShapeDtypeStruct((NUM_CORES * 8, 128), jnp.float32),
        grid_spec=pltpu.PrefetchScalarGridSpec(
            num_scalar_prefetch=0,
            grid=grid,
            in_specs=[
                pl.BlockSpec((4, T), in_map),   # loc_preds   (dtype preserved)
                pl.BlockSpec((4, T), in_map),   # loc_targets (dtype preserved)
                pl.BlockSpec((C, T), in_map),   # cls_preds   (dtype preserved)
                pl.BlockSpec((1, T), in_map),   # cls_targets (int32)
            ],
            out_specs=pl.BlockSpec((8, 128), lambda c, i: (c, 0)),
            scratch_shapes=[pltpu.VMEM((1, T), jnp.float32),
                            pltpu.VMEM((1, T), jnp.float32)],
        ),
        compiler_params=pltpu.CompilerParams(
            dimension_semantics=("parallel", "arbitrary"),
            allow_input_fusion=[True, True, True, True]),
        cost_estimate=cost,
    )(loc_p, loc_t, cls_p, cls_t)

    parts = parts.reshape(NUM_CORES, 8, 128)
    loss_sum = jnp.sum(parts[:, 0, 0])
    num_pos = jnp.sum(parts[:, 0, 1])
    # NOTE: num_pos == 0 yields Inf/NaN, mirroring the PyTorch reference.
    return loss_sum / num_pos


# --------------------------------------------------------------------------
# Convenience wrapper matching the PyTorch forward() signature/layouts
# --------------------------------------------------------------------------
def focal_loss(loc_preds, loc_targets, cls_preds, cls_targets,
               num_classes=20, alpha=0.25, max_tile=MAX_TILE):
    """loc_preds/targets: (B, A, 4); cls_preds: (B, A, C); cls_targets: (B, A)
    int (-1 ignore, 0 background, 1..C positive).  Dtypes are preserved (bf16
    preds halve DMA bytes); math is f32 in-kernel."""
    B, A, _ = loc_preds.shape
    C = cls_preds.shape[-1]
    assert C == num_classes
    N = B * A
    # Layout glue: anchors on the 128-lane axis.  If the producing network can
    # emit (C, N)/(4, N) directly, call focal_loss_pretransposed and skip these
    # transposes; allow_input_fusion lets XLA fuse them into the call otherwise.
    loc_p = loc_preds.reshape(N, 4).T
    loc_t = loc_targets.reshape(N, 4).T
    cls_p = cls_preds.reshape(N, C).T
    cls_t = cls_targets.reshape(1, N).astype(jnp.int32)
    return focal_loss_pretransposed(loc_p, loc_t, cls_p, cls_t,
                                    alpha=alpha, max_tile=max_tile)


# --------------------------------------------------------------------------
# Pure-JAX reference (mirrors the PyTorch forward; masked-sum == gather+sum)
# --------------------------------------------------------------------------
def focal_loss_ref(loc_preds, loc_targets, cls_preds, cls_targets,
                   num_classes=20, alpha=0.25):
    loc_preds = loc_preds.astype(jnp.float32)
    loc_targets = loc_targets.astype(jnp.float32)
    cls_preds = cls_preds.astype(jnp.float32)

    pos = cls_targets > 0
    num_pos = jnp.sum(pos.astype(jnp.float32))

    d = loc_preds - loc_targets
    ad = jnp.abs(d)
    sl1 = jnp.where(ad < 1.0, 0.5 * d * d, ad - 0.5)
    loc_loss = jnp.sum(sl1 * pos[..., None].astype(jnp.float32))

    valid = (cls_targets > -1).astype(jnp.float32)
    t = jax.nn.one_hot(cls_targets, num_classes + 1)[..., 1:]   # drop class 0
    z = 2.0 * (cls_preds * (2.0 * t - 1.0)) + 1.0
    log_pt = jnp.minimum(z, 0.0) - jnp.log(1.0 + jnp.exp(-jnp.abs(z)))
    wgt = alpha * t + (1.0 - alpha) * (1.0 - t)
    cls_loss = jnp.sum((-0.5) * wgt * log_pt * valid[..., None])

    return (loc_loss + cls_loss) / num_pos


# --------------------------------------------------------------------------
if __name__ == "__main__":
    key = jax.random.PRNGKey(0)
    k1, k2, k3, k4 = jax.random.split(key, 4)

    # --- f32 check: B=2, A=1024 anchors, RetinaNet's 20 classes -------------
    B, A, C = 2, 1024, 20
    loc_preds = jax.random.normal(k1, (B, A, 4), jnp.float32)
    loc_targets = jax.random.normal(k2, (B, A, 4), jnp.float32)
    cls_preds = jax.random.normal(k3, (B, A, C), jnp.float32)
    # targets in {-1 (ignore), 0 (background), 1..C (positive class ids)}
    cls_targets = jax.random.randint(k4, (B, A), -1, C + 1).astype(jnp.int32)

    loss = jax.jit(focal_loss)(loc_preds, loc_targets, cls_preds, cls_targets)
    jax.block_until_ready(loss)
    ref = focal_loss_ref(loc_preds, loc_targets, cls_preds, cls_targets)
    assert bool(jnp.isfinite(loss)), loss
    rel = abs(float(loss) - float(ref)) / max(1.0, abs(float(ref)))
    assert rel < 1e-4, (float(loss), float(ref))

    # --- bf16 inputs + ragged anchor count + multi-block / both-core path ---
    k5, k6, k7, k8 = jax.random.split(jax.random.PRNGKey(1), 4)
    B2, A2 = 2, 1000                      # N = 2000: not a multiple of the tile
    lp2 = jax.random.normal(k5, (B2, A2, 4), jnp.float32).astype(jnp.bfloat16)
    lt2 = jax.random.normal(k6, (B2, A2, 4), jnp.float32).astype(jnp.bfloat16)
    cp2 = jax.random.normal(k7, (B2, A2, C), jnp.float32).astype(jnp.bfloat16)
    ct2 = jax.random.randint(k8, (B2, A2), -1, C + 1).astype(jnp.int32)

    loss2 = jax.jit(functools.partial(focal_loss, max_tile=512))(lp2, lt2, cp2, ct2)
    jax.block_until_ready(loss2)
    ref2 = focal_loss_ref(lp2, lt2, cp2, ct2)
    assert bool(jnp.isfinite(loss2)), loss2
    rel2 = abs(float(loss2) - float(ref2)) / max(1.0, abs(float(ref2)))
    assert rel2 < 1e-3, (float(loss2), float(ref2))

    print("KERNEL_OK")
</pallas_src>

<mosaic_0001>
module attributes {stable_mosaic.version = 11 : i64} {
  func.func @_focal_loss_kernel(%arg0: i32, %arg1: i32, %arg2: memref<4x2048xf32, #tpu.memory_space<vmem>>, %arg3: memref<4x2048xf32, #tpu.memory_space<vmem>>, %arg4: memref<20x2048xf32, #tpu.memory_space<vmem>>, %arg5: memref<1x2048xi32, #tpu.memory_space<vmem>>, %arg6: memref<8x128xf32, #tpu.memory_space<vmem>>, %arg7: memref<1x2048xf32, #tpu.memory_space<vmem>>, %arg8: memref<1x2048xf32, #tpu.memory_space<vmem>>) attributes {dimension_semantics = [#tpu.dimension_semantics<parallel>, #tpu.dimension_semantics<arbitrary>], iteration_bounds = array<i64: 2, 1>, scalar_prefetch = 0 : i64, scratch_operands = 2 : i64, tpu.core_type = #tpu.core_type<tc>, window_params = [{transform_indices = @transform_0, window_bounds = array<i64: 4, 2048>}, {transform_indices = @transform_1, window_bounds = array<i64: 4, 2048>}, {transform_indices = @transform_2, window_bounds = array<i64: 20, 2048>}, {transform_indices = @transform_3, window_bounds = array<i64: 1, 2048>}, {transform_indices = @transform_4, window_bounds = array<i64: 8, 128>}]} {
    %c0_i32 = arith.constant 0 : i32
    %0 = arith.cmpi eq, %arg1, %c0_i32 : i32
    %1 = arith.extui %0 : i1 to i32
    %c0_i32_0 = arith.constant 0 : i32
    %2 = arith.cmpi ne, %1, %c0_i32_0 : i32
    scf.if %2 {
      %cst = arith.constant 0.000000e+00 : f32
      %12 = vector.broadcast %cst : f32 to vector<1x2048xf32>
      %c0 = arith.constant 0 : index
      %c0_5 = arith.constant 0 : index
      %13 = vector.load %arg7[%c0, %c0_5] : memref<1x2048xf32, #tpu.memory_space<vmem>>, vector<1x2048xf32>
      tpu.vector_store %arg7[%c0, %c0_5], %12 {strides = array<i32>} : memref<1x2048xf32, #tpu.memory_space<vmem>>, vector<1x2048xf32>,
      %cst_6 = arith.constant 0.000000e+00 : f32
      %14 = vector.broadcast %cst_6 : f32 to vector<1x2048xf32>
      %c0_7 = arith.constant 0 : index
      %c0_8 = arith.constant 0 : index
      %15 = vector.load %arg8[%c0_7, %c0_8] : memref<1x2048xf32, #tpu.memory_space<vmem>>, vector<1x2048xf32>
      tpu.vector_store %arg8[%c0_7, %c0_8], %14 {strides = array<i32>} : memref<1x2048xf32, #tpu.memory_space<vmem>>, vector<1x2048xf32>,
    } else {
    }
    %c1_i32 = arith.constant 1 : i32
    %3 = arith.muli %arg0, %c1_i32 : i32
    %4 = arith.addi %3, %arg1 : i32
    %c2048_i32 = arith.constant 2048 : i32
    %5 = arith.muli %4, %c2048_i32 : i32
    %c2048_i32_1 = arith.constant 2048 : i32
    %6 = arith.cmpi slt, %5, %c2048_i32_1 : i32
    %7 = arith.extui %6 : i1 to i32
    %c0_i32_2 = arith.constant 0 : i32
    %8 = arith.cmpi ne, %7, %c0_i32_2 : i32
    scf.if %8 {
      %12 = tpu.iota {dimensions = array<i32: 1>} : vector<1x2048xi32>
      %13 = vector.broadcast %5 : i32 to vector<1x2048xi32>
      %14 = arith.addi %13, %12 : vector<1x2048xi32>
      %c2048_i32_5 = arith.constant 2048 : i32
      %15 = vector.broadcast %c2048_i32_5 : i32 to vector<1x2048xi32>
      %16 = arith.cmpi slt, %14, %15 : vector<1x2048xi32>
      %c0 = arith.constant 0 : index
      %c0_6 = arith.constant 0 : index
      %17 = vector.load %arg5[%c0, %c0_6] : memref<1x2048xi32, #tpu.memory_space<vmem>>, vector<1x2048xi32>
      %c0_i32_7 = arith.constant 0 : i32
      %18 = vector.broadcast %c0_i32_7 : i32 to vector<1x2048xi32>
      %19 = arith.cmpi sgt, %17, %18 : vector<1x2048xi32>
      %20 = arith.andi %19, %16 : vector<1x2048xi1>
      %c-1_i32 = arith.constant -1 : i32
      %21 = vector.broadcast %c-1_i32 : i32 to vector<1x2048xi32>
      %22 = arith.cmpi sgt, %17, %21 : vector<1x2048xi32>
      %23 = arith.andi %22, %16 : vector<1x2048xi1>
      %c0_8 = arith.constant 0 : index
      %c0_9 = arith.constant 0 : index
      %24 = vector.load %arg2[%c0_8, %c0_9] : memref<4x2048xf32, #tpu.memory_space<vmem>>, vector<4x2048xf32>
      %c0_10 = arith.constant 0 : index
      %c0_11 = arith.constant 0 : index
      %25 = vector.load %arg3[%c0_10, %c0_11] : memref<4x2048xf32, #tpu.memory_space<vmem>>, vector<4x2048xf32>
      %26 = arith.subf %24, %25 : vector<4x2048xf32>
      %27 = math.absf %26 : vector<4x2048xf32>
      %cst = arith.constant 1.000000e+00 : f32
      %28 = vector.broadcast %cst : f32 to vector<4x2048xf32>
      %29 = arith.cmpf olt, %27, %28 : vector<4x2048xf32>
      %cst_12 = arith.constant 5.000000e-01 : f32
      %30 = vector.broadcast %cst_12 : f32 to vector<4x2048xf32>
      %31 = arith.mulf %30, %26 : vector<4x2048xf32>
      %32 = arith.mulf %31, %26 : vector<4x2048xf32>
      %cst_13 = arith.constant 5.000000e-01 : f32
      %33 = vector.broadcast %cst_13 : f32 to vector<4x2048xf32>
      %34 = arith.subf %27, %33 : vector<4x2048xf32>
      %35 = arith.select %29, %32, %34 : vector<4x2048xi1>, vector<4x2048xf32>
      %cst_14 = arith.constant 0.000000e+00 : f32
      %36 = vector.shape_cast %20 : vector<1x2048xi1> to vector<1x2048xi1>
      %37 = vector.broadcast %36 : vector<1x2048xi1> to vector<4x2048xi1>
      %38 = vector.broadcast %cst_14 : f32 to vector<4x2048xf32>
      %39 = arith.select %37, %35, %38 : vector<4x2048xi1>, vector<4x2048xf32>
      %cst_15 = arith.constant dense<0.000000e+00> : vector<2048xf32>
      %40 = vector.multi_reduction <add>, %39, %cst_15 [0] : vector<4x2048xf32> to vector<2048xf32>
      %41 = vector.shape_cast %40 : vector<2048xf32> to vector<1x2048xf32>
      %c0_16 = arith.constant 0 : index
      %c0_17 = arith.constant 0 : index
      %42 = vector.load %arg4[%c0_16, %c0_17] : memref<20x2048xf32, #tpu.memory_space<vmem>>, vector<20x2048xf32>
      %43 = tpu.iota {dimensions = array<i32: 0>} : vector<20x1xi32>
      %c1_i32_18 = arith.constant 1 : i32
      %44 = vector.broadcast %c1_i32_18 : i32 to vector<20x1xi32>
      %45 = arith.addi %43, %44 : vector<20x1xi32>
      %46 = vector.broadcast %17 : vector<1x2048xi32> to vector<20x2048xi32>
      %47 = vector.broadcast %45 : vector<20x1xi32> to vector<20x2048xi32>
      %48 = arith.cmpi eq, %46, %47 : vector<20x2048xi32>
      %49 = arith.addf %42, %42 : vector<20x2048xf32>
      %cst_19 = arith.constant 1.000000e+00 : f32
      %50 = vector.broadcast %cst_19 : f32 to vector<20x2048xf32>
      %51 = arith.addf %49, %50 : vector<20x2048xf32>
      %cst_20 = arith.constant 1.000000e+00 : f32
      %52 = vector.broadcast %cst_20 : f32 to vector<20x2048xf32>
      %53 = arith.subf %52, %49 : vector<20x2048xf32>
      %54 = arith.select %48, %51, %53 : vector<20x2048xi1>, vector<20x2048xf32>
      %cst_21 = arith.constant 0.000000e+00 : f32
      %55 = vector.broadcast %cst_21 : f32 to vector<20x2048xf32>
      %56 = arith.minimumf %54, %55 : vector<20x2048xf32>
      %57 = math.absf %54 : vector<20x2048xf32>
      %cst_22 = arith.constant 0.000000e+00 : f32
      %58 = vector.broadcast %cst_22 : f32 to vector<20x2048xf32>
      %59 = arith.subf %58, %57 : vector<20x2048xf32>
      %60 = math.exp %59 : vector<20x2048xf32>
      %cst_23 = arith.constant 1.000000e+00 : f32
      %61 = vector.broadcast %cst_23 : f32 to vector<20x2048xf32>
      %62 = arith.addf %61, %60 : vector<20x2048xf32>
      %63 = math.log %62 : vector<20x2048xf32>
      %64 = arith.subf %56, %63 : vector<20x2048xf32>
      %cst_24 = arith.constant -1.250000e-01 : f32
      %cst_25 = arith.constant -3.750000e-01 : f32
      %65 = vector.broadcast %cst_24 : f32 to vector<20x2048xf32>
      %66 = vector.broadcast %cst_25 : f32 to vector<20x2048xf32>
      %67 = arith.select %48, %65, %66 : vector<20x2048xi1>, vector<20x2048xf32>
      %68 = arith.mulf %67, %64 : vector<20x2048xf32>
      %cst_26 = arith.constant 0.000000e+00 : f32
      %69 = vector.shape_cast %23 : vector<1x2048xi1> to vector<1x2048xi1>
      %70 = vector.broadcast %69 : vector<1x2048xi1> to vector<20x2048xi1>
      %71 = vector.broadcast %cst_26 : f32 to vector<20x2048xf32>
      %72 = arith.select %70, %68, %71 : vector<20x2048xi1>, vector<20x2048xf32>
      %cst_27 = arith.constant dense<0.000000e+00> : vector<2048xf32>
      %73 = vector.multi_reduction <add>, %72, %cst_27 [0] : vector<20x2048xf32> to vector<2048xf32>
      %74 = vector.shape_cast %73 : vector<2048xf32> to vector<1x2048xf32>
      %c0_28 = arith.constant 0 : index
      %c0_29 = arith.constant 0 : index
      %75 = vector.load %arg7[%c0_28, %c0_29] : memref<1x2048xf32, #tpu.memory_space<vmem>>, vector<1x2048xf32>
      %76 = arith.addf %41, %74 : vector<1x2048xf32>
      %77 = arith.addf %75, %76 : vector<1x2048xf32>
      %c0_30 = arith.constant 0 : index
      %c0_31 = arith.constant 0 : index
      %78 = vector.load %arg7[%c0_30, %c0_31] : memref<1x2048xf32, #tpu.memory_space<vmem>>, vector<1x2048xf32>
      tpu.vector_store %arg7[%c0_30, %c0_31], %77 {strides = array<i32>} : memref<1x2048xf32, #tpu.memory_space<vmem>>, vector<1x2048xf32>,
      %c0_32 = arith.constant 0 : index
      %c0_33 = arith.constant 0 : index
      %79 = vector.load %arg8[%c0_32, %c0_33] : memref<1x2048xf32, #tpu.memory_space<vmem>>, vector<1x2048xf32>
      %80 = arith.extui %20 : vector<1x2048xi1> to vector<1x2048xi32>
      %81 = arith.sitofp %80 : vector<1x2048xi32> to vector<1x2048xf32>
      %82 = arith.addf %79, %81 : vector<1x2048xf32>
      %c0_34 = arith.constant 0 : index
      %c0_35 = arith.constant 0 : index
      %83 = vector.load %arg8[%c0_34, %c0_35] : memref<1x2048xf32, #tpu.memory_space<vmem>>, vector<1x2048xf32>
      tpu.vector_store %arg8[%c0_34, %c0_35], %82 {strides = array<i32>} : memref<1x2048xf32, #tpu.memory_space<vmem>>, vector<1x2048xf32>,
    } else {
    }
    %c0_i32_3 = arith.constant 0 : i32
    %9 = arith.cmpi eq, %arg1, %c0_i32_3 : i32
    %10 = arith.extui %9 : i1 to i32
    %c0_i32_4 = arith.constant 0 : i32
    %11 = arith.cmpi ne, %10, %c0_i32_4 : i32
    scf.if %11 {
      %c0 = arith.constant 0 : index
      %c0_5 = arith.constant 0 : index
      %12 = vector.load %arg7[%c0, %c0_5] : memref<1x2048xf32, #tpu.memory_space<vmem>>, vector<1x2048xf32>
      %cst = arith.constant dense<0.000000e+00> : vector<1xf32>
      %13 = vector.multi_reduction <add>, %12, %cst [1] : vector<1x2048xf32> to vector<1xf32>
      %14 = vector.shape_cast %13 : vector<1xf32> to vector<1x1xf32>
      %c0_6 = arith.constant 0 : index
      %c0_7 = arith.constant 0 : index
      %15 = vector.load %arg8[%c0_6, %c0_7] : memref<1x2048xf32, #tpu.memory_space<vmem>>, vector<1x2048xf32>
      %cst_8 = arith.constant dense<0.000000e+00> : vector<1xf32>
      %16 = vector.multi_reduction <add>, %15, %cst_8 [1] : vector<1x2048xf32> to vector<1xf32>
      %17 = vector.shape_cast %16 : vector<1xf32> to vector<1x1xf32>
      %18 = tpu.iota {dimensions = array<i32: 1>} : vector<8x128xi32>
      %c0_i32_9 = arith.constant 0 : i32
      %19 = vector.broadcast %c0_i32_9 : i32 to vector<8x128xi32>
      %20 = arith.cmpi eq, %18, %19 : vector<8x128xi32>
      %c1_i32_10 = arith.constant 1 : i32
      %21 = vector.broadcast %c1_i32_10 : i32 to vector<8x128xi32>
      %22 = arith.cmpi eq, %18, %21 : vector<8x128xi32>
      %cst_11 = arith.constant 0.000000e+00 : f32
      %23 = vector.shape_cast %17 : vector<1x1xf32> to vector<1x1xf32>
      %24 = vector.broadcast %23 : vector<1x1xf32> to vector<8x128xf32>
      %25 = vector.broadcast %cst_11 : f32 to vector<8x128xf32>
      %26 = arith.select %22, %24, %25 : vector<8x128xi1>, vector<8x128xf32>
      %27 = vector.shape_cast %14 : vector<1x1xf32> to vector<1x1xf32>
      %28 = vector.broadcast %27 : vector<1x1xf32> to vector<8x128xf32>
      %29 = arith.select %20, %28, %26 : vector<8x128xi1>, vector<8x128xf32>
      %c0_12 = arith.constant 0 : index
      %c0_13 = arith.constant 0 : index
      %30 = vector.load %arg6[%c0_12, %c0_13] : memref<8x128xf32, #tpu.memory_space<vmem>>, vector<8x128xf32>
      tpu.vector_store %arg6[%c0_12, %c0_13], %29 {strides = array<i32>} : memref<8x128xf32, #tpu.memory_space<vmem>>, vector<8x128xf32>,
    } else {
    }
    return
  }
  func.func @transform_0(%arg0: i32, %arg1: i32) -> (i32, i32) {
    %c1_i32 = arith.constant 1 : i32
    %0 = arith.muli %arg0, %c1_i32 : i32
    %1 = arith.addi %0, %arg1 : i32
    %c0_i32 = arith.constant 0 : i32
    %2 = arith.minsi %1, %c0_i32 : i32
    %c0_i32_0 = arith.constant 0 : i32
    %c0_i32_1 = arith.constant 0 : i32
    return %c0_i32_0, %2 : i32, i32
  }
  func.func @transform_1(%arg0: i32, %arg1: i32) -> (i32, i32) {
    %c1_i32 = arith.constant 1 : i32
    %0 = arith.muli %arg0, %c1_i32 : i32
    %1 = arith.addi %0, %arg1 : i32
    %c0_i32 = arith.constant 0 : i32
    %2 = arith.minsi %1, %c0_i32 : i32
    %c0_i32_0 = arith.constant 0 : i32
    %c0_i32_1 = arith.constant 0 : i32
    return %c0_i32_0, %2 : i32, i32
  }
  func.func @transform_2(%arg0: i32, %arg1: i32) -> (i32, i32) {
    %c1_i32 = arith.constant 1 : i32
    %0 = arith.muli %arg0, %c1_i32 : i32
    %1 = arith.addi %0, %arg1 : i32
    %c0_i32 = arith.constant 0 : i32
    %2 = arith.minsi %1, %c0_i32 : i32
    %c0_i32_0 = arith.constant 0 : i32
    %c0_i32_1 = arith.constant 0 : i32
    return %c0_i32_0, %2 : i32, i32
  }
  func.func @transform_3(%arg0: i32, %arg1: i32) -> (i32, i32) {
    %c1_i32 = arith.constant 1 : i32
    %0 = arith.muli %arg0, %c1_i32 : i32
    %1 = arith.addi %0, %arg1 : i32
    %c0_i32 = arith.constant 0 : i32
    %2 = arith.minsi %1, %c0_i32 : i32
    %c0_i32_0 = arith.constant 0 : i32
    %c0_i32_1 = arith.constant 0 : i32
    return %c0_i32_0, %2 : i32, i32
  }
  func.func @transform_4(%arg0: i32, %arg1: i32) -> (i32, i32) {
    %c0_i32 = arith.constant 0 : i32
    %c0_i32_0 = arith.constant 0 : i32
    return %arg0, %c0_i32 : i32, i32
  }
}

</mosaic_0001>

<llo_original>
// kernel: focal_loss.2
$region0: #{focal_loss.2}
  #allocation0 [shape = 'u32[]', space=smem, size = 0x4, offset = 0x4, fixed_abs, tag = 'smem constant byte address 0x4 - core index']
  #allocation1 [shape = 'u32[144,128]{1,0:T(1,128)}', space=vmem, size = 0x12000, scoped, tag = 'internal scratch']
  #allocation2 [shape = 'f32[1,2048]{1,0:T(1,128)}', space=vmem, size = 0x2000, scoped, tag = 'scratch operand']
  #allocation3 [shape = 'f32[1,2048]{1,0:T(1,128)}', space=vmem, size = 0x2000, scoped, tag = 'scratch operand']
  %s0 = inlined_call_operand.vmem [shape: f32[4,2048], index: 0, kind: input, shape index: {}]
  %s1 = inlined_call_operand.vmem [shape: f32[4,2048], index: 1, kind: input, shape index: {}]
  %s2 = inlined_call_operand.vmem [shape: s32[1,2048], index: 2, kind: input, shape index: {}]
  %s3 = inlined_call_operand.vmem [shape: f32[2048,20], index: 3, kind: input, shape index: {}]
  %s4 = inlined_call_operand.vmem [shape: f32[16,128], index: 4, kind: output, shape index: {}]
  %s5 = sld [smem:[#allocation0]]
  $region61: #{focal_loss.2} parent=0
    _
  %s7 = ssub.s32 1, %s5
  %s8 = scalar_select 0, %s7, %s5
  loop: start=0, step=1, limit=4
  $region2: #{focal_loss.2} parent=0 // loop_pre_header
    _
  $region3: #{focal_loss.2} parent=0 // loop_header
    %s10 = sphi 0, %s14
    %p11 = scmp.ge.s32.totalorder %s10, 4
    %s17 = sphi 0, %s29
    %s18 = sphi 0, %s25
    %s19 = sphi 0, %s17
    %s20 = sphi 0, %s18
    %s21 = sphi 0, %s19
    %s22 = sphi 0, %s20
    %s38 = sphi 0, %s40
    %s41 = sphi 0, %s38
    %s42 = sphi 0, %s41
    %s58 = sphi 0, %s42
    %s70 = sphi 0, %s72
    %s73 = sphi 0, %s70
    %s74 = sphi 0, %s73
    %s90 = sphi 0, %s74
    %s102 = sphi 0, %s104
    %s105 = sphi 0, %s102
    %s106 = sphi 0, %s105
    %s122 = sphi 0, %s106
    %s134 = sphi 0, %s136
    %s137 = sphi 0, %s134
    %s138 = sphi 0, %s137
    %s154 = sphi 0, %s138
    %s160 = sphi 0, %s162
    %s163 = sphi 0, %s160
    %s164 = sphi 0, %s163
    %s180 = sphi 0, %s164
  $region4: #{focal_loss.2} parent=0 // loop_header_branch
    %13 = sbr.rel (%p11) target = $region8
  $region5: #{focal_loss.2} parent=0 // loop_body
    %s15 = ssub.s32 %s10, 1
    %s16 = ssub.s32 %s10, 2
    %s23 = sadd.s32 1, %s18
    %p24 = scmp.ge.s32.totalorder %s23, 1
    %s25 = scalar_select %p24, 0, %s23
    %s26 = sadd.s32 1, %s17
    %s27 = scalar_select %p24, %s26, %s17
    %p28 = scmp.ge.s32.totalorder %s27, 2
    %s29 = scalar_select %p28, 0, %s27
    %s30 = sadd.s32 %s17, %s18
    %p31 = scmp.lt.s32.totalorder %s30, 0
    %s32 = scalar_select %p31, %s30, 0
    %s33 = sadd.s32 %s29, %s25
    %p34 = scmp.lt.s32.totalorder %s33, 0
    %s35 = scalar_select %p34, %s33, 0
    %s36 = ssub.s32 %s32, %s35
    %p37 = scmp.eq.s32.totalorder %s36, 0
    %s39 = sadd.s32 %s38, 1
    %s40 = scalar_select %p37, %s38, %s39
    %p43 = pneg %p37
    %p44 = scmp.eq.s32.totalorder %s10, 1
    %p45 = por %p43, %p44
    %p46 = scmp.ne.s32.totalorder %s38, %s41
    %p47 = scmp.eq.s32.totalorder %s10, 0
    %p48 = por %p46, %p47
    %p49 = scmp.ne.s32.totalorder %s38, %s41
    %p50 = scmp.eq.s32.totalorder %s15, 1
    %p51 = por %p49, %p50
    %p52 = scmp.ne.s32.totalorder %s41, %s42
    %p53 = scmp.eq.s32.totalorder %s15, 0
    %p54 = por %p52, %p53
    %p55 = scmp.ne.s32.totalorder %s41, %s42
    %p56 = scmp.eq.s32.totalorder %s16, 1
    %p57 = por %p55, %p56
    %p59 = scmp.ne.s32.totalorder %s42, %s58
    %p60 = scmp.eq.s32.totalorder %s16, 0
    %p61 = por %p59, %p60
    %s62 = sadd.s32 %s17, %s18
    %p63 = scmp.lt.s32.totalorder %s62, 0
    %s64 = scalar_select %p63, %s62, 0
    %s65 = sadd.s32 %s29, %s25
    %p66 = scmp.lt.s32.totalorder %s65, 0
    %s67 = scalar_select %p66, %s65, 0
    %s68 = ssub.s32 %s64, %s67
    %p69 = scmp.eq.s32.totalorder %s68, 0
    %s71 = sadd.s32 %s70, 1
    %s72 = scalar_select %p69, %s70, %s71
    %p75 = pneg %p69
    %p76 = scmp.eq.s32.totalorder %s10, 1
    %p77 = por %p75, %p76
    %p78 = scmp.ne.s32.totalorder %s70, %s73
    %p79 = scmp.eq.s32.totalorder %s10, 0
    %p80 = por %p78, %p79
    %p81 = scmp.ne.s32.totalorder %s70, %s73
    %p82 = scmp.eq.s32.totalorder %s15, 1
    %p83 = por %p81, %p82
    %p84 = scmp.ne.s32.totalorder %s73, %s74
    %p85 = scmp.eq.s32.totalorder %s15, 0
    %p86 = por %p84, %p85
    %p87 = scmp.ne.s32.totalorder %s73, %s74
    %p88 = scmp.eq.s32.totalorder %s16, 1
    %p89 = por %p87, %p88
    %p91 = scmp.ne.s32.totalorder %s74, %s90
    %p92 = scmp.eq.s32.totalorder %s16, 0
    %p93 = por %p91, %p92
    %s94 = sadd.s32 %s17, %s18
    %p95 = scmp.lt.s32.totalorder %s94, 0
    %s96 = scalar_select %p95, %s94, 0
    %s97 = sadd.s32 %s29, %s25
    %p98 = scmp.lt.s32.totalorder %s97, 0
    %s99 = scalar_select %p98, %s97, 0
    %s100 = ssub.s32 %s96, %s99
    %p101 = scmp.eq.s32.totalorder %s100, 0
    %s103 = sadd.s32 %s102, 1
    %s104 = scalar_select %p101, %s102, %s103
    %p107 = pneg %p101
    %p108 = scmp.eq.s32.totalorder %s10, 1
    %p109 = por %p107, %p108
    %p110 = scmp.ne.s32.totalorder %s102, %s105
    %p111 = scmp.eq.s32.totalorder %s10, 0
    %p112 = por %p110, %p111
    %p113 = scmp.ne.s32.totalorder %s102, %s105
    %p114 = scmp.eq.s32.totalorder %s15, 1
    %p115 = por %p113, %p114
    %p116 = scmp.ne.s32.totalorder %s105, %s106
    %p117 = scmp.eq.s32.totalorder %s15, 0
    %p118 = por %p116, %p117
    %p119 = scmp.ne.s32.totalorder %s105, %s106
    %p120 = scmp.eq.s32.totalorder %s16, 1
    %p121 = por %p119, %p120
    %p123 = scmp.ne.s32.totalorder %s106, %s122
    %p124 = scmp.eq.s32.totalorder %s16, 0
    %p125 = por %p123, %p124
    %s126 = sadd.s32 %s17, %s18
    %p127 = scmp.lt.s32.totalorder %s126, 0
    %s128 = scalar_select %p127, %s126, 0
    %s129 = sadd.s32 %s29, %s25
    %p130 = scmp.lt.s32.totalorder %s129, 0
    %s131 = scalar_select %p130, %s129, 0
    %s132 = ssub.s32 %s128, %s131
    %p133 = scmp.eq.s32.totalorder %s132, 0
    %s135 = sadd.s32 %s134, 1
    %s136 = scalar_select %p133, %s134, %s135
    %p139 = pneg %p133
    %p140 = scmp.eq.s32.totalorder %s10, 1
    %p141 = por %p139, %p140
    %p142 = scmp.ne.s32.totalorder %s134, %s137
    %p143 = scmp.eq.s32.totalorder %s10, 0
    %p144 = por %p142, %p143
    %p145 = scmp.ne.s32.totalorder %s134, %s137
    %p146 = scmp.eq.s32.totalorder %s15, 1
    %p147 = por %p145, %p146
    %p148 = scmp.ne.s32.totalorder %s137, %s138
    %p149 = scmp.eq.s32.totalorder %s15, 0
    %p150 = por %p148, %p149
    %p151 = scmp.ne.s32.totalorder %s137, %s138
    %p152 = scmp.eq.s32.totalorder %s16, 1
    %p153 = por %p151, %p152
    %p155 = scmp.ne.s32.totalorder %s138, %s154
    %p156 = scmp.eq.s32.totalorder %s16, 0
    %p157 = por %p155, %p156
    %s158 = ssub.s32 %s17, %s29
    %p159 = scmp.eq.s32.totalorder %s158, 0
    %s161 = sadd.s32 %s160, 1
    %s162 = scalar_select %p159, %s160, %s161
    %p165 = pneg %p159
    %p166 = scmp.eq.s32.totalorder %s10, 1
    %p167 = por %p165, %p166
    %p168 = scmp.ne.s32.totalorder %s160, %s163
    %p169 = scmp.eq.s32.totalorder %s10, 0
    %p170 = por %p168, %p169
    %p171 = scmp.ne.s32.totalorder %s160, %s163
    %p172 = scmp.eq.s32.totalorder %s15, 1
    %p173 = por %p171, %p172
    %p174 = scmp.ne.s32.totalorder %s163, %s164
    %p175 = scmp.eq.s32.totalorder %s15, 0
    %p176 = por %p174, %p175
    %p177 = scmp.ne.s32.totalorder %s163, %s164
    %p178 = scmp.eq.s32.totalorder %s16, 1
    %p179 = por %p177, %p178
    %p181 = scmp.ne.s32.totalorder %s164, %s180
    %p182 = scmp.eq.s32.totalorder %s16, 0
    %p183 = por %p181, %p182
    %p184 = scmp.le.s32.totalorder 1, %s10
    %p185 = scmp.lt.s32.totalorder %s10, 3
    %p186 = pnand %p184, %p185
    %p187 = pneg %p186
    // Predicated region
    $region9: #{focal_loss.2} parent=5 // pred_check
      _
    $region10: #{focal_loss.2} parent=5 // pred_check_branch
      %189 = sbr.rel (%p186) target = $region12
    $region11: #{focal_loss.2} parent=5 // pred_region
      %s190 = ssub.s32 %s10, 1
    $region12: #{focal_loss.2} parent=5 // pred_fallthru
      _
    %p191 = scmp.lt.s32.totalorder %s10, 2
    // Predicated region
    $region13: #{focal_loss.2} parent=5 // pred_check
      %p192 = pneg %p191
    $region14: #{focal_loss.2} parent=5 // pred_check_branch
      %194 = sbr.rel (%p192) target = $region16
    $region15: #{focal_loss.2} parent=5 // pred_region
      // Predicated region
      $region17: #{focal_loss.2} parent=15 // pred_check
        %p195 = pneg %p48
      $region18: #{focal_loss.2} parent=15 // pred_check_branch
        %197 = sbr.rel (%p195) target = $region20
      $region19: #{focal_loss.2} parent=15 // pred_region
        %s198 = sadd.s32 %s17, %s18
        %p199 = scmp.lt.s32.totalorder %s198, 0
        %s200 = scalar_select %p199, %s198, 0
        %s201 = smul.u32 16, %s200
        %p202 = scmp.lt.s32.totalorder %s201, 15
        %s203 = scalar_select %p202, %s201, 15
        %s204 = smul.addr %s203, 4
        %s205 = scalar_lea.vmem %s0, %s204
        %s206 = sadd.s32 %s17, %s18
        %p207 = scmp.lt.s32.totalorder %s206, 0
        %s208 = scalar_select %p207, %s206, 0
        %s209 = smul.u32 16, %s208
      $region20: #{focal_loss.2} parent=15 // pred_fallthru
        _
      // Predicated region
      $region21: #{focal_loss.2} parent=15 // pred_check
        %p210 = pneg %p80
      $region22: #{focal_loss.2} parent=15 // pred_check_branch
        %212 = sbr.rel (%p210) target = $region24
      $region23: #{focal_loss.2} parent=15 // pred_region
        %s213 = sadd.s32 %s17, %s18
        %p214 = scmp.lt.s32.totalorder %s213, 0
        %s215 = scalar_select %p214, %s213, 0
        %s216 = smul.u32 16, %s215
        %p217 = scmp.lt.s32.totalorder %s216, 15
        %s218 = scalar_select %p217, %s216, 15
        %s219 = smul.addr %s218, 4
        %s220 = scalar_lea.vmem %s1, %s219
        %s221 = sadd.s32 %s17, %s18
        %p222 = scmp.lt.s32.totalorder %s221, 0
        %s223 = scalar_select %p222, %s221, 0
        %s224 = smul.u32 16, %s223
      $region24: #{focal_loss.2} parent=15 // pred_fallthru
        _
      // Predicated region
      $region25: #{focal_loss.2} parent=15 // pred_check
        %p225 = pneg %p112
      $region26: #{focal_loss.2} parent=15 // pred_check_branch
        %227 = sbr.rel (%p225) target = $region28
      $region27: #{focal_loss.2} parent=15 // pred_region
        %s228 = sadd.s32 %s17, %s18
        %p229 = scmp.lt.s32.totalorder %s228, 0
        %s230 = scalar_select %p229, %s228, 0
        %s231 = smul.u32 16, %s230
        %p232 = scmp.lt.s32.totalorder %s231, 15
        %s233 = scalar_select %p232, %s231, 15
        %s234 = smul.addr %s233, 8
        %s235 = scalar_lea.vmem %s3, %s234
        %s236 = sadd.s32 %s17, %s18
        %p237 = scmp.lt.s32.totalorder %s236, 0
        %s238 = scalar_select %p237, %s236, 0
        %s239 = smul.u32 16, %s238
      $region28: #{focal_loss.2} parent=15 // pred_fallthru
        _
      // Predicated region
      $region29: #{focal_loss.2} parent=15 // pred_check
        %p240 = pneg %p144
      $region30: #{focal_loss.2} parent=15 // pred_check_branch
        %242 = sbr.rel (%p240) target = $region32
      $region31: #{focal_loss.2} parent=15 // pred_region
        %s243 = sadd.s32 %s17, %s18
        %p244 = scmp.lt.s32.totalorder %s243, 0
        %s245 = scalar_select %p244, %s243, 0
        %s246 = smul.u32 16, %s245
        %p247 = scmp.lt.s32.totalorder %s246, 15
        %s248 = scalar_select %p247, %s246, 15
        %s249 = scalar_lea.vmem %s2, %s248
        %s250 = sadd.s32 %s17, %s18
        %p251 = scmp.lt.s32.totalorder %s250, 0
        %s252 = scalar_select %p251, %s250, 0
        %s253 = smul.u32 16, %s252
      $region32: #{focal_loss.2} parent=15 // pred_fallthru
        _
    $region16: #{focal_loss.2} parent=5 // pred_fallthru
      _
    %p254 = scmp.le.s32.totalorder 1, %s10
    %p255 = scmp.lt.s32.totalorder %s10, 3
    %p256 = pnand %p254, %p255
    %p257 = pneg %p256
    // Predicated region
    $region33: #{focal_loss.2} parent=5 // pred_check
      _
    $region34: #{focal_loss.2} parent=5 // pred_check_branch
      %259 = sbr.rel (%p256) target = $region36
    $region35: #{focal_loss.2} parent=5 // pred_region
      #allocation4 [shape = 'u8[196608]{0}', space=vmem, size = 0x30000, dematerialized = true, scoped, tag = 'FusionAdapter Buffer %fusion.1 = f32[20,2048]{1,0:T(8,128)} fusion(%param_3.1), kind=kLoop, calls=%fused_computation.1.clone, metadata={op_name="jit(focal_loss)/transpose" stack_frame_id=12}']
      %s260 = ssub.s32 %s10, 1
      %s261 = sadd.s32 %s19, %s20
      %p262 = scmp.lt.s32.totalorder %s261, 0
      %s263 = scalar_select %p262, %s261, 0
      %s264 = smul.u32 16, %s263
      %p265 = scmp.lt.s32.totalorder %s264, 15
      %s266 = scalar_select %p265, %s264, 15
      %s267 = smul.addr %s266, 4
      %s268 = scalar_lea.vmem %s0, %s267
      %p269 = pneg %p54
      %p270 = pneg %p51
      %s271 = sadd.s32 %s19, %s20
      %p272 = scmp.lt.s32.totalorder %s271, 0
      %s273 = scalar_select %p272, %s271, 0
      %s274 = smul.u32 16, %s273
      %p275 = scmp.lt.s32.totalorder %s274, 15
      %s276 = scalar_select %p275, %s274, 15
      %s277 = smul.addr %s276, 4
      %s278 = scalar_lea.vmem %s1, %s277
      %p279 = pneg %p86
      %p280 = pneg %p83
      %s281 = sadd.s32 %s19, %s20
      %p282 = scmp.lt.s32.totalorder %s281, 0
      %s283 = scalar_select %p282, %s281, 0
      %s284 = smul.u32 16, %s283
      %p285 = scmp.lt.s32.totalorder %s284, 15
      %s286 = scalar_select %p285, %s284, 15
      %s287 = smul.addr %s286, 8
      %s288 = scalar_lea.vmem %s3, %s287
      %p289 = pneg %p118
      %p290 = pneg %p115
      %s291 = sadd.s32 %s19, %s20
      %p292 = scmp.lt.s32.totalorder %s291, 0
      %s293 = scalar_select %p292, %s291, 0
      %s294 = smul.u32 16, %s293
      %p295 = scmp.lt.s32.totalorder %s294, 15
      %s296 = scalar_select %p295, %s294, 15
      %s297 = scalar_lea.vmem %s2, %s296
      %p298 = pneg %p150
      %p299 = pneg %p147
      %p300 = pneg %p176
      %p301 = pneg %p173
      %p302 = scmp.lt.s32.totalorder %s19, 1
      %s303 = scalar_select %p302, %s19, 1
      %s304 = smul.addr %s303, 8
      %s305 = scalar_lea.vmem %s4, %s304
      %s306 = sadd.s32 %s19, %s20
      %p307 = scmp.lt.s32.totalorder %s306, 0
      %s308 = scalar_select %p307, %s306, 0
      %s309 = smul.u32 16, %s308
      %p310 = scmp.lt.s32.totalorder %s309, 15
      %s311 = scalar_select %p310, %s309, 15
      %s312 = smul.addr %s311, 4
      %s313 = scalar_lea.vmem %s0, %s312
      %s314 = sadd.s32 %s19, %s20
      %p315 = scmp.lt.s32.totalorder %s314, 0
      %s316 = scalar_select %p315, %s314, 0
      %s317 = smul.u32 16, %s316
      %s318 = sadd.s32 %s19, %s20
      %p319 = scmp.lt.s32.totalorder %s318, 0
      %s320 = scalar_select %p319, %s318, 0
      %s321 = smul.u32 16, %s320
      %p322 = scmp.lt.s32.totalorder %s321, 15
      %s323 = scalar_select %p322, %s321, 15
      %s324 = smul.addr %s323, 4
      %s325 = scalar_lea.vmem %s1, %s324
      %s326 = sadd.s32 %s19, %s20
      %p327 = scmp.lt.s32.totalorder %s326, 0
      %s328 = scalar_select %p327, %s326, 0
      %s329 = smul.u32 16, %s328
      %s330 = sadd.s32 %s19, %s20
      %p331 = scmp.lt.s32.totalorder %s330, 0
      %s332 = scalar_select %p331, %s330, 0
      %s333 = smul.u32 16, %s332
      %p334 = scmp.lt.s32.totalorder %s333, 15
      %s335 = scalar_select %p334, %s333, 15
      %s336 = smul.addr %s335, 8
      %s337 = scalar_lea.vmem %s3, %s336
      %s338 = sadd.s32 %s19, %s20
      %p339 = scmp.lt.s32.totalorder %s338, 0
      %s340 = scalar_select %p339, %s338, 0
      %s341 = smul.u32 16, %s340
      %s342 = sadd.s32 %s19, %s20
      %p343 = scmp.lt.s32.totalorder %s342, 0
      %s344 = scalar_select %p343, %s342, 0
      %s345 = smul.u32 16, %s344
      %p346 = scmp.lt.s32.totalorder %s345, 15
      %s347 = scalar_select %p346, %s345, 15
      %s348 = scalar_lea.vmem %s2, %s347
      %s349 = sadd.s32 %s19, %s20
      %p350 = scmp.lt.s32.totalorder %s349, 0
      %s351 = scalar_select %p350, %s349, 0
      %s352 = smul.u32 16, %s351
      %p353 = scmp.lt.s32.totalorder %s19, 1
      %s354 = scalar_select %p353, %s19, 1
      %s355 = smul.addr %s354, 8
      %s356 = scalar_lea.vmem %s4, %s355
      %v357 = vld [vmem:[%s337] sm:$0xff]
      %s359 = ssub.s32 256, 1
      %360 = vst [vmem:[#allocation4] sm:%s359] %v357
      %s361 = scalar_lea.vmem %s337, 8
      %v362 = vld [vmem:[%s361] sm:$0xff]
      %s363 = scalar_lea.vmem [#allocation4], 8
      %s365 = ssub.s32 256, 1
      %366 = vst [vmem:[%s363] sm:%s365] %v362
      %s367 = scalar_lea.vmem %s337, 16
      %v368 = vld [vmem:[%s367] sm:$0xff]
      %s369 = scalar_lea.vmem [#allocation4], 16
      %s371 = ssub.s32 256, 1
      %372 = vst [vmem:[%s369] sm:%s371] %v368
      %s373 = scalar_lea.vmem %s337, 24
      %v374 = vld [vmem:[%s373] sm:$0xff]
      %s375 = scalar_lea.vmem [#allocation4], 24
      %s377 = ssub.s32 256, 1
      %378 = vst [vmem:[%s375] sm:%s377] %v374
      %s379 = scalar_lea.vmem %s337, 32
      %v380 = vld [vmem:[%s379] sm:$0xff]
      %s381 = scalar_lea.vmem [#allocation4], 32
      %s383 = ssub.s32 256, 1
      %384 = vst [vmem:[%s381] sm:%s383] %v380
      %s385 = scalar_lea.vmem %s337, 40
      %v386 = vld [vmem:[%s385] sm:$0xff]
      %s387 = scalar_lea.vmem [#allocation4], 40
      %s389 = ssub.s32 256, 1
      %390 = vst [vmem:[%s387] sm:%s389] %v386
      %s391 = scalar_lea.vmem %s337, 48
      %v392 = vld [vmem:[%s391] sm:$0xff]
      %s393 = scalar_lea.vmem [#allocation4], 48
      %s395 = ssub.s32 256, 1
      %396 = vst [vmem:[%s393] sm:%s395] %v392
      %s397 = scalar_lea.vmem %s337, 56
      %v398 = vld [vmem:[%s397] sm:$0xff]
      %s399 = scalar_lea.vmem [#allocation4], 56
      %s401 = ssub.s32 256, 1
      %402 = vst [vmem:[%s399] sm:%s401] %v398
      %s403 = scalar_lea.vmem %s337, 64
      %v404 = vld [vmem:[%s403] sm:$0xff]
      %s405 = scalar_lea.vmem [#allocation4], 64
      %s407 = ssub.s32 256, 1
      %408 = vst [vmem:[%s405] sm:%s407] %v404
      %s409 = scalar_lea.vmem %s337, 72
      %v410 = vld [vmem:[%s409] sm:$0xff]
      %s411 = scalar_lea.vmem [#allocation4], 72
      %s413 = ssub.s32 256, 1
      %414 = vst [vmem:[%s411] sm:%s413] %v410
      %s415 = scalar_lea.vmem %s337, 80
      %v416 = vld [vmem:[%s415] sm:$0xff]
      %s417 = scalar_lea.vmem [#allocation4], 80
      %s419 = ssub.s32 256, 1
      %420 = vst [vmem:[%s417] sm:%s419] %v416
      %s421 = scalar_lea.vmem %s337, 88
      %v422 = vld [vmem:[%s421] sm:$0xff]
      %s423 = scalar_lea.vmem [#allocation4], 88
      %s425 = ssub.s32 256, 1
      %426 = vst [vmem:[%s423] sm:%s425] %v422
      %s427 = scalar_lea.vmem %s337, 96
      %v428 = vld [vmem:[%s427] sm:$0xff]
      %s429 = scalar_lea.vmem [#allocation4], 96
      %s431 = ssub.s32 256, 1
      %432 = vst [vmem:[%s429] sm:%s431] %v428
      %s433 = scalar_lea.vmem %s337, 104
      %v434 = vld [vmem:[%s433] sm:$0xff]
      %s435 = scalar_lea.vmem [#allocation4], 104
      %s437 = ssub.s32 256, 1
      %438 = vst [vmem:[%s435] sm:%s437] %v434
      %s439 = scalar_lea.vmem %s337, 112
      %v440 = vld [vmem:[%s439] sm:$0xff]
      %s441 = scalar_lea.vmem [#allocation4], 112
      %s443 = ssub.s32 256, 1
      %444 = vst [vmem:[%s441] sm:%s443] %v440
      %s445 = scalar_lea.vmem %s337, 120
      %v446 = vld [vmem:[%s445] sm:$0xff]
      %s447 = scalar_lea.vmem [#allocation4], 120
      %s449 = ssub.s32 256, 1
      %450 = vst [vmem:[%s447] sm:%s449] %v446
      %s451 = scalar_lea.vmem %s337, 128
      %v452 = vld [vmem:[%s451] sm:$0xff]
      %s453 = scalar_lea.vmem [#allocation4], 128
      %s455 = ssub.s32 256, 1
      %456 = vst [vmem:[%s453] sm:%s455] %v452
      %s457 = scalar_lea.vmem %s337, 136
      %v458 = vld [vmem:[%s457] sm:$0xff]
      %s459 = scalar_lea.vmem [#allocation4], 136
      %s461 = ssub.s32 256, 1
      %462 = vst [vmem:[%s459] sm:%s461] %v458
      %s463 = scalar_lea.vmem %s337, 144
      %v464 = vld [vmem:[%s463] sm:$0xff]
      %s465 = scalar_lea.vmem [#allocation4], 144
      %s467 = ssub.s32 256, 1
      %468 = vst [vmem:[%s465] sm:%s467] %v464
      %s469 = scalar_lea.vmem %s337, 152
      %v470 = vld [vmem:[%s469] sm:$0xff]
      %s471 = scalar_lea.vmem [#allocation4], 152
      %s473 = ssub.s32 256, 1
      %474 = vst [vmem:[%s471] sm:%s473] %v470
      %s475 = scalar_lea.vmem %s337, 160
      %v476 = vld [vmem:[%s475] sm:$0xff]
      %s477 = scalar_lea.vmem [#allocation4], 160
      %s479 = ssub.s32 256, 1
      %480 = vst [vmem:[%s477] sm:%s479] %v476
      %s481 = scalar_lea.vmem %s337, 168
      %v482 = vld [vmem:[%s481] sm:$0xff]
      %s483 = scalar_lea.vmem [#allocation4], 168
      %s485 = ssub.s32 256, 1
      %486 = vst [vmem:[%s483] sm:%s485] %v482
      %s487 = scalar_lea.vmem %s337, 176
      %v488 = vld [vmem:[%s487] sm:$0xff]
      %s489 = scalar_lea.vmem [#allocation4], 176
      %s491 = ssub.s32 256, 1
      %492 = vst [vmem:[%s489] sm:%s491] %v488
      %s493 = scalar_lea.vmem %s337, 184
      %v494 = vld [vmem:[%s493] sm:$0xff]
      %s495 = scalar_lea.vmem [#allocation4], 184
      %s497 = ssub.s32 256, 1
      %498 = vst [vmem:[%s495] sm:%s497] %v494
      %s499 = scalar_lea.vmem %s337, 192
      %v500 = vld [vmem:[%s499] sm:$0xff]
      %s501 = scalar_lea.vmem [#allocation4], 192
      %s503 = ssub.s32 256, 1
      %504 = vst [vmem:[%s501] sm:%s503] %v500
      %s505 = scalar_lea.vmem %s337, 200
      %v506 = vld [vmem:[%s505] sm:$0xff]
      %s507 = scalar_lea.vmem [#allocation4], 200
      %s509 = ssub.s32 256, 1
      %510 = vst [vmem:[%s507] sm:%s509] %v506
      %s511 = scalar_lea.vmem %s337, 208
      %v512 = vld [vmem:[%s511] sm:$0xff]
      %s513 = scalar_lea.vmem [#allocation4], 208
      %s515 = ssub.s32 256, 1
      %516 = vst [vmem:[%s513] sm:%s515] %v512
      %s517 = scalar_lea.vmem %s337, 216
      %v518 = vld [vmem:[%s517] sm:$0xff]
      %s519 = scalar_lea.vmem [#allocation4], 216
      %s521 = ssub.s32 256, 1
      %522 = vst [vmem:[%s519] sm:%s521] %v518
      %s523 = scalar_lea.vmem %s337, 224
      %v524 = vld [vmem:[%s523] sm:$0xff]
      %s525 = scalar_lea.vmem [#allocation4], 224
      %s527 = ssub.s32 256, 1
      %528 = vst [vmem:[%s525] sm:%s527] %v524
      %s529 = scalar_lea.vmem %s337, 232
      %v530 = vld [vmem:[%s529] sm:$0xff]
      %s531 = scalar_lea.vmem [#allocation4], 232
      %s533 = ssub.s32 256, 1
      %534 = vst [vmem:[%s531] sm:%s533] %v530
      %s535 = scalar_lea.vmem %s337, 240
      %v536 = vld [vmem:[%s535] sm:$0xff]
      %s537 = scalar_lea.vmem [#allocation4], 240
      %s539 = ssub.s32 256, 1
      %540 = vst [vmem:[%s537] sm:%s539] %v536
      %s541 = scalar_lea.vmem %s337, 248
      %v542 = vld [vmem:[%s541] sm:$0xff]
      %s543 = scalar_lea.vmem [#allocation4], 248
      %s545 = ssub.s32 256, 1
      %546 = vst [vmem:[%s543] sm:%s545] %v542
      %s547 = scalar_lea.vmem %s337, 256
      %v548 = vld [vmem:[%s547] sm:$0xff]
      %s549 = scalar_lea.vmem [#allocation4], 256
      %s551 = ssub.s32 256, 1
      %552 = vst [vmem:[%s549] sm:%s551] %v548
      %s553 = scalar_lea.vmem %s337, 264
      %v554 = vld [vmem:[%s553] sm:$0xff]
      %s555 = scalar_lea.vmem [#allocation4], 264
      %s557 = ssub.s32 256, 1
      %558 = vst [vmem:[%s555] sm:%s557] %v554
      %s559 = scalar_lea.vmem %s337, 272
      %v560 = vld [vmem:[%s559] sm:$0xff]
      %s561 = scalar_lea.vmem [#allocation4], 272
      %s563 = ssub.s32 256, 1
      %564 = vst [vmem:[%s561] sm:%s563] %v560
      %s565 = scalar_lea.vmem %s337, 280
      %v566 = vld [vmem:[%s565] sm:$0xff]
      %s567 = scalar_lea.vmem [#allocation4], 280
      %s569 = ssub.s32 256, 1
      %570 = vst [vmem:[%s567] sm:%s569] %v566
      %s571 = scalar_lea.vmem %s337, 288
      %v572 = vld [vmem:[%s571] sm:$0xff]
      %s573 = scalar_lea.vmem [#allocation4], 288
      %s575 = ssub.s32 256, 1
      %576 = vst [vmem:[%s573] sm:%s575] %v572
      %s577 = scalar_lea.vmem %s337, 296
      %v578 = vld [vmem:[%s577] sm:$0xff]
      %s579 = scalar_lea.vmem [#allocation4], 296
      %s581 = ssub.s32 256, 1
      %582 = vst [vmem:[%s579] sm:%s581] %v578
      %s583 = scalar_lea.vmem %s337, 304
      %v584 = vld [vmem:[%s583] sm:$0xff]
      %s585 = scalar_lea.vmem [#allocation4], 304
      %s587 = ssub.s32 256, 1
      %588 = vst [vmem:[%s585] sm:%s587] %v584
      %s589 = scalar_lea.vmem %s337, 312
      %v590 = vld [vmem:[%s589] sm:$0xff]
      %s591 = scalar_lea.vmem [#allocation4], 312
      %s593 = ssub.s32 256, 1
      %594 = vst [vmem:[%s591] sm:%s593] %v590
      %s595 = scalar_lea.vmem %s337, 320
      %v596 = vld [vmem:[%s595] sm:$0xff]
      %s597 = scalar_lea.vmem [#allocation4], 320
      %s599 = ssub.s32 256, 1
      %600 = vst [vmem:[%s597] sm:%s599] %v596
      %s601 = scalar_lea.vmem %s337, 328
      %v602 = vld [vmem:[%s601] sm:$0xff]
      %s603 = scalar_lea.vmem [#allocation4], 328
      %s605 = ssub.s32 256, 1
      %606 = vst [vmem:[%s603] sm:%s605] %v602
      %s607 = scalar_lea.vmem %s337, 336
      %v608 = vld [vmem:[%s607] sm:$0xff]
      %s609 = scalar_lea.vmem [#allocation4], 336
      %s611 = ssub.s32 256, 1
      %612 = vst [vmem:[%s609] sm:%s611] %v608
      %s613 = scalar_lea.vmem %s337, 344
      %v614 = vld [vmem:[%s613] sm:$0xff]
      %s615 = scalar_lea.vmem [#allocation4], 344
      %s617 = ssub.s32 256, 1
      %618 = vst [vmem:[%s615] sm:%s617] %v614
      %s619 = scalar_lea.vmem %s337, 352
      %v620 = vld [vmem:[%s619] sm:$0xff]
      %s621 = scalar_lea.vmem [#allocation4], 352
      %s623 = ssub.s32 256, 1
      %624 = vst [vmem:[%s621] sm:%s623] %v620
      %s625 = scalar_lea.vmem %s337, 360
      %v626 = vld [vmem:[%s625] sm:$0xff]
      %s627 = scalar_lea.vmem [#allocation4], 360
      %s629 = ssub.s32 256, 1
      %630 = vst [vmem:[%s627] sm:%s629] %v626
      %s631 = scalar_lea.vmem %s337, 368
      %v632 = vld [vmem:[%s631] sm:$0xff]
      %s633 = scalar_lea.vmem [#allocation4], 368
      %s635 = ssub.s32 256, 1
      %636 = vst [vmem:[%s633] sm:%s635] %v632
      %s637 = scalar_lea.vmem %s337, 376
      %v638 = vld [vmem:[%s637] sm:$0xff]
      %s639 = scalar_lea.vmem [#allocation4], 376
      %s641 = ssub.s32 256, 1
      %642 = vst [vmem:[%s639] sm:%s641] %v638
      %p643 = scmp.eq.s32.totalorder %s20, 0
      // Predicated region
      $region37: #{focal_loss.2} parent=35 // pred_check
        %p644 = pneg %p643
      $region38: #{focal_loss.2} parent=35 // pred_check_branch
        %646 = sbr.rel (%p644) target = $region40
      $region39: #{focal_loss.2} parent=35 // pred_region
        %647 = vst [vmem:[#allocation2] sm:$0xff] 0.0
        %648 = vst [vmem:[#allocation2 + $0x8] sm:$0xff] 0.0
        %649 = vst [vmem:[#allocation3] sm:$0xff] 0.0
        %650 = vst [vmem:[#allocation3 + $0x8] sm:$0xff] 0.0
      $region40: #{focal_loss.2} parent=35 // pred_fallthru
        _
      %s651 = sadd.s32 %s19, %s20
      %s652 = smul.u32 %s651, 2048
      %p653 = scmp.lt.s32.totalorder %s652, 2048
      // Predicated region
      $region41: #{focal_loss.2} parent=35 // pred_check
        %p654 = pneg %p653
      $region42: #{focal_loss.2} parent=35 // pred_check_branch
        %656 = sbr.rel (%p654) target = $region44
      $region43: #{focal_loss.2} parent=35 // pred_region
        %v657 = vlaneseq
        %v658 = vand.u32 %v657, 127
        %v659 = vadd.s32 %v658, 128
        %v660 = vadd.s32 %v658, 256
        %v661 = vadd.s32 %v658, 384
        %v662 = vadd.s32 %v658, 512
        %v663 = vadd.s32 %v658, 640
        %v664 = vadd.s32 %v658, 768
        %v665 = vadd.s32 %v658, 896
        %v666 = vadd.s32 %v658, 1024
        %v667 = vadd.s32 %v658, 1152
        %v668 = vadd.s32 %v658, 1280
        %v669 = vadd.s32 %v658, 1408
        %v670 = vadd.s32 %v658, 1536
        %v671 = vadd.s32 %v658, 1664
        %v672 = vadd.s32 %v658, 1792
        %v673 = vadd.s32 %v658, 1920
        %v674 = vstv %s652
        %v675 = vadd.s32 %v674, %v658
        %v676 = vadd.s32 %v674, %v659
        %v677 = vadd.s32 %v674, %v660
        %v678 = vadd.s32 %v674, %v661
        %v679 = vadd.s32 %v674, %v662
        %v680 = vadd.s32 %v674, %v663
        %v681 = vadd.s32 %v674, %v664
        %v682 = vadd.s32 %v674, %v665
        %v683 = vadd.s32 %v674, %v666
        %v684 = vadd.s32 %v674, %v667
        %v685 = vadd.s32 %v674, %v668
        %v686 = vadd.s32 %v674, %v669
        %v687 = vadd.s32 %v674, %v670
        %v688 = vadd.s32 %v674, %v671
        %v689 = vadd.s32 %v674, %v672
        %v690 = vadd.s32 %v674, %v673
        %vm691 = vcmp.lt.s32.totalorder %v675, 2048
        %vm692 = vcmp.lt.s32.totalorder %v676, 2048
        %vm693 = vcmp.lt.s32.totalorder %v677, 2048
        %vm694 = vcmp.lt.s32.totalorder %v678, 2048
        %vm695 = vcmp.lt.s32.totalorder %v679, 2048
        %vm696 = vcmp.lt.s32.totalorder %v680, 2048
        %vm697 = vcmp.lt.s32.totalorder %v681, 2048
        %vm698 = vcmp.lt.s32.totalorder %v682, 2048
        %vm699 = vcmp.lt.s32.totalorder %v683, 2048
        %vm700 = vcmp.lt.s32.totalorder %v684, 2048
        %vm701 = vcmp.lt.s32.totalorder %v685, 2048
        %vm702 = vcmp.lt.s32.totalorder %v686, 2048
        %vm703 = vcmp.lt.s32.totalorder %v687, 2048
        %vm704 = vcmp.lt.s32.totalorder %v688, 2048
        %vm705 = vcmp.lt.s32.totalorder %v689, 2048
        %vm706 = vcmp.lt.s32.totalorder %v690, 2048
        %v707 = vld [vmem:[%s348] sm:$0xff]
        %v708 = vld [vmem:[%s348 + $0x8] sm:$0xff]
        %vm709 = vcmp.gt.s32.totalorder %v707, 0
        %vm710 = vcmp.gt.s32.totalorder %v708, 0
        %v711 = vsel %vm691, 1, 0
        %v712 = vsel %vm692, 1, 0
        %v713 = vsel %vm693, 1, 0
        %v714 = vsel %vm694, 1, 0
        %v715 = vsel %vm695, 1, 0
        %v716 = vsel %vm696, 1, 0
        %v717 = vsel %vm697, 1, 0
        %v718 = vsel %vm698, 1, 0
        %v719 = vsel %vm699, 1, 0
        %v720 = vsel %vm700, 1, 0
        %v721 = vsel %vm701, 1, 0
        %v722 = vsel %vm702, 1, 0
        %v723 = vsel %vm703, 1, 0
        %v724 = vsel %vm704, 1, 0
        %v725 = vsel %vm705, 1, 0
        %v726 = vsel %vm706, 1, 0
        %v727 = vcombine.low %v711, %v712
        %v728 = vcombine.low %v713, %v714
        %v729 = vcombine.low %v715, %v716
        %v730 = vcombine.low %v717, %v718
        %v732 = vunpack.c.l.s4 1966171168
        %v733 = vunpack.c.0.s8 %v732
        %v734 = vlaneseq
        %v735 = vshrl.u32 %v734, 7
        %v736 = vsub.s32 %v733, %v735
        %v737 = vrot.slane %v727, %v736
        %v739 = vunpack.c.l.s4 1966171168
        %v740 = vunpack.c.0.s8 %v739
        %v741 = vlaneseq
        %v742 = vshrl.u32 %v741, 7
        %v743 = vsub.s32 %v740, %v742
        %v744 = vrot.slane %v728, %v743
        %v746 = vunpack.c.l.s4 1966171168
        %v747 = vunpack.c.0.s8 %v746
        %v748 = vlaneseq
        %v749 = vshrl.u32 %v748, 7
        %v750 = vsub.s32 %v747, %v749
        %v751 = vrot.slane %v729, %v750
        %v753 = vunpack.c.l.s4 1966171168
        %v754 = vunpack.c.0.s8 %v753
        %v755 = vlaneseq
        %v756 = vshrl.u32 %v755, 7
        %v757 = vsub.s32 %v754, %v756
        %v758 = vrot.slane %v730, %v757
        %v759 = vcombine.low %v737, %v744
        %v760 = vcombine.low %v751, %v758
        %v762 = vunpack.c.l.s4 1966171168
        %v763 = vunpack.c.0.s8 %v762
        %v764 = vlaneseq
        %v765 = vshrl.u32 %v764, 7
        %v766 = vsub.s32 %v763, %v765
        %v767 = vrot.slane %v759, %v766
        %v769 = vunpack.c.l.s4 1966171168
        %v770 = vunpack.c.0.s8 %v769
        %v771 = vlaneseq
        %v772 = vshrl.u32 %v771, 7
        %v773 = vsub.s32 %v770, %v772
        %v774 = vrot.slane %v760, %v773
        %v775 = vcombine.low %v767, %v774
        %v776 = vcombine.low %v719, %v720
        %v777 = vcombine.low %v721, %v722
        %v778 = vcombine.low %v723, %v724
        %v779 = vcombine.low %v725, %v726
        %v781 = vunpack.c.l.s4 1966171168
        %v782 = vunpack.c.0.s8 %v781
        %v783 = vlaneseq
        %v784 = vshrl.u32 %v783, 7
        %v785 = vsub.s32 %v782, %v784
        %v786 = vrot.slane %v776, %v785
        %v788 = vunpack.c.l.s4 1966171168
        %v789 = vunpack.c.0.s8 %v788
        %v790 = vlaneseq
        %v791 = vshrl.u32 %v790, 7
        %v792 = vsub.s32 %v789, %v791
        %v793 = vrot.slane %v777, %v792
        %v795 = vunpack.c.l.s4 1966171168
        %v796 = vunpack.c.0.s8 %v795
        %v797 = vlaneseq
        %v798 = vshrl.u32 %v797, 7
        %v799 = vsub.s32 %v796, %v798
        %v800 = vrot.slane %v778, %v799
        %v802 = vunpack.c.l.s4 1966171168
        %v803 = vunpack.c.0.s8 %v802
        %v804 = vlaneseq
        %v805 = vshrl.u32 %v804, 7
        %v806 = vsub.s32 %v803, %v805
        %v807 = vrot.slane %v779, %v806
        %v808 = vcombine.low %v786, %v793
        %v809 = vcombine.low %v800, %v807
        %v811 = vunpack.c.l.s4 1966171168
        %v812 = vunpack.c.0.s8 %v811
        %v813 = vlaneseq
        %v814 = vshrl.u32 %v813, 7
        %v815 = vsub.s32 %v812, %v814
        %v816 = vrot.slane %v808, %v815
        %v818 = vunpack.c.l.s4 1966171168
        %v819 = vunpack.c.0.s8 %v818
        %v820 = vlaneseq
        %v821 = vshrl.u32 %v820, 7
        %v822 = vsub.s32 %v819, %v821
        %v823 = vrot.slane %v809, %v822
        %v824 = vcombine.low %v816, %v823
        %vm825 = vcmp.ne.s32.totalorder %v775, 0
        %vm826 = vcmp.ne.s32.totalorder %v824, 0
        %vm827 = vmand %vm709, %vm825
        %vm828 = vmand %vm710, %vm826
        %vm829 = vcmp.gt.s32.totalorder %v707, 4294967295
        %vm830 = vcmp.gt.s32.totalorder %v708, 4294967295
        %vm831 = vmand %vm829, %vm825
        %vm832 = vmand %vm830, %vm826
        %v833 = vld [vmem:[%s313] sm:$0xff]
        %v834 = vld [vmem:[%s313 + $0x8] sm:$0xff]
        %v835 = vld [vmem:[%s313 + $0x10] sm:$0xff]
        %v836 = vld [vmem:[%s313 + $0x18] sm:$0xff]
        %v837 = vld [vmem:[%s313 + $0x20] sm:$0xff]
        %v838 = vld [vmem:[%s313 + $0x28] sm:$0xff]
        %v839 = vld [vmem:[%s313 + $0x30] sm:$0xff]
        %v840 = vld [vmem:[%s313 + $0x38] sm:$0xff]
        %v841 = vld [vmem:[%s325] sm:$0xff]
        %v842 = vld [vmem:[%s325 + $0x8] sm:$0xff]
        %v843 = vld [vmem:[%s325 + $0x10] sm:$0xff]
        %v844 = vld [vmem:[%s325 + $0x18] sm:$0xff]
        %v845 = vld [vmem:[%s325 + $0x20] sm:$0xff]
        %v846 = vld [vmem:[%s325 + $0x28] sm:$0xff]
        %v847 = vld [vmem:[%s325 + $0x30] sm:$0xff]
        %v848 = vld [vmem:[%s325 + $0x38] sm:$0xff]
        %v849 = vsub.f32 %v833, %v841
        %v850 = vsub.f32 %v834, %v842
        %v851 = vsub.f32 %v835, %v843
        %v852 = vsub.f32 %v836, %v844
        %v853 = vsub.f32 %v837, %v845
        %v854 = vsub.f32 %v838, %v846
        %v855 = vsub.f32 %v839, %v847
        %v856 = vsub.f32 %v840, %v848
        %v857 = vand.u32 2147483647, %v849
        %v858 = vand.u32 2147483647, %v850
        %v859 = vand.u32 2147483647, %v851
        %v860 = vand.u32 2147483647, %v852
        %v861 = vand.u32 2147483647, %v853
        %v862 = vand.u32 2147483647, %v854
        %v863 = vand.u32 2147483647, %v855
        %v864 = vand.u32 2147483647, %v856
        %vm865 = vcmp.lt.f32.partialorder %v857, 1.0
        %vm866 = vcmp.lt.f32.partialorder %v858, 1.0
        %vm867 = vcmp.lt.f32.partialorder %v859, 1.0
        %vm868 = vcmp.lt.f32.partialorder %v860, 1.0
        %vm869 = vcmp.lt.f32.partialorder %v861, 1.0
        %vm870 = vcmp.lt.f32.partialorder %v862, 1.0
        %vm871 = vcmp.lt.f32.partialorder %v863, 1.0
        %vm872 = vcmp.lt.f32.partialorder %v864, 1.0
        %v873 = vmul.f32 %v849, 0.5
        %v874 = vmul.f32 %v850, 0.5
        %v875 = vmul.f32 %v851, 0.5
        %v876 = vmul.f32 %v852, 0.5
        %v877 = vmul.f32 %v853, 0.5
        %v878 = vmul.f32 %v854, 0.5
        %v879 = vmul.f32 %v855, 0.5
        %v880 = vmul.f32 %v856, 0.5
        %v881 = vmul.f32 %v873, %v849
        %v882 = vmul.f32 %v874, %v850
        %v883 = vmul.f32 %v875, %v851
        %v884 = vmul.f32 %v876, %v852
        %v885 = vmul.f32 %v877, %v853
        %v886 = vmul.f32 %v878, %v854
        %v887 = vmul.f32 %v879, %v855
        %v888 = vmul.f32 %v880, %v856
        %v889 = vsub.f32 %v857, 0.5
        %v890 = vsub.f32 %v858, 0.5
        %v891 = vsub.f32 %v859, 0.5
        %v892 = vsub.f32 %v860, 0.5
        %v893 = vsub.f32 %v861, 0.5
        %v894 = vsub.f32 %v862, 0.5
        %v895 = vsub.f32 %v863, 0.5
        %v896 = vsub.f32 %v864, 0.5
        %v897 = vsel %vm865, %v881, %v889
        %v898 = vsel %vm866, %v882, %v890
        %v899 = vsel %vm867, %v883, %v891
        %v900 = vsel %vm868, %v884, %v892
        %v901 = vsel %vm869, %v885, %v893
        %v902 = vsel %vm870, %v886, %v894
        %v903 = vsel %vm871, %v887, %v895
        %v904 = vsel %vm872, %v888, %v896
        %v905 = vsel %vm827, 1, 0
        %v906 = vsel %vm828, 1, 0
        %v907 = vlaneseq
        %v908 = vshrl.u32 %v907, 7
        %v909 = vsub.s32 0, %v908
        %v910 = vrot.slane %v905, %v909
        %v911 = vlaneseq
        %v912 = vshrl.u32 %v911, 7
        %v913 = vsub.s32 1, %v912
        %v914 = vrot.slane %v905, %v913
        %v915 = vlaneseq
        %v916 = vshrl.u32 %v915, 7
        %v917 = vsub.s32 2, %v916
        %v918 = vrot.slane %v905, %v917
        %v919 = vlaneseq
        %v920 = vshrl.u32 %v919, 7
        %v921 = vsub.s32 3, %v920
        %v922 = vrot.slane %v905, %v921
        %v923 = vlaneseq
        %v924 = vshrl.u32 %v923, 7
        %v925 = vsub.s32 4, %v924
        %v926 = vrot.slane %v905, %v925
        %v927 = vlaneseq
        %v928 = vshrl.u32 %v927, 7
        %v929 = vsub.s32 5, %v928
        %v930 = vrot.slane %v905, %v929
        %v931 = vlaneseq
        %v932 = vshrl.u32 %v931, 7
        %v933 = vsub.s32 6, %v932
        %v934 = vrot.slane %v905, %v933
        %v935 = vlaneseq
        %v936 = vshrl.u32 %v935, 7
        %v937 = vsub.s32 7, %v936
        %v938 = vrot.slane %v905, %v937
        %v939 = vlaneseq
        %v940 = vshrl.u32 %v939, 7
        %v941 = vsub.s32 0, %v940
        %v942 = vrot.slane %v906, %v941
        %v943 = vlaneseq
        %v944 = vshrl.u32 %v943, 7
        %v945 = vsub.s32 1, %v944
        %v946 = vrot.slane %v906, %v945
        %v947 = vlaneseq
        %v948 = vshrl.u32 %v947, 7
        %v949 = vsub.s32 2, %v948
        %v950 = vrot.slane %v906, %v949
        %v951 = vlaneseq
        %v952 = vshrl.u32 %v951, 7
        %v953 = vsub.s32 3, %v952
        %v954 = vrot.slane %v906, %v953
        %v955 = vlaneseq
        %v956 = vshrl.u32 %v955, 7
        %v957 = vsub.s32 4, %v956
        %v958 = vrot.slane %v906, %v957
        %v959 = vlaneseq
        %v960 = vshrl.u32 %v959, 7
        %v961 = vsub.s32 5, %v960
        %v962 = vrot.slane %v906, %v961
        %v963 = vlaneseq
        %v964 = vshrl.u32 %v963, 7
        %v965 = vsub.s32 6, %v964
        %v966 = vrot.slane %v906, %v965
        %v967 = vlaneseq
        %v968 = vshrl.u32 %v967, 7
        %v969 = vsub.s32 7, %v968
        %v970 = vrot.slane %v906, %v969
        %vm971 = vcmp.eq.s32.totalorder %v910, 1
        %vm972 = vcmp.eq.s32.totalorder %v914, 1
        %vm973 = vcmp.eq.s32.totalorder %v918, 1
        %vm974 = vcmp.eq.s32.totalorder %v922, 1
        %vm975 = vcmp.eq.s32.totalorder %v926, 1
        %vm976 = vcmp.eq.s32.totalorder %v930, 1
        %vm977 = vcmp.eq.s32.totalorder %v934, 1
        %vm978 = vcmp.eq.s32.totalorder %v938, 1
        %vm979 = vcmp.eq.s32.totalorder %v942, 1
        %vm980 = vcmp.eq.s32.totalorder %v946, 1
        %vm981 = vcmp.eq.s32.totalorder %v950, 1
        %vm982 = vcmp.eq.s32.totalorder %v954, 1
        %vm983 = vcmp.eq.s32.totalorder %v958, 1
        %vm984 = vcmp.eq.s32.totalorder %v962, 1
        %vm985 = vcmp.eq.s32.totalorder %v966, 1
        %vm986 = vcmp.eq.s32.totalorder %v970, 1
        %v995 = vcombine.high %v897, %v897
        %v996 = vcombine.high %v898, %v898
        %v997 = vcombine.high %v899, %v899
        %v998 = vcombine.high %v900, %v900
        %v999 = vcombine.high %v901, %v901
        %v1000 = vcombine.high %v902, %v902
        %v1001 = vcombine.high %v903, %v903
        %v1002 = vcombine.high %v904, %v904
        %v1011 = vsel %vm971, %v897, 0.0
        %v1012 = vsel %vm972, %v995, 0.0
        %v1013 = vsel %vm973, %v898, 0.0
        %v1014 = vsel %vm974, %v996, 0.0
        %v1015 = vsel %vm975, %v899, 0.0
        %v1016 = vsel %vm976, %v997, 0.0
        %v1017 = vsel %vm977, %v900, 0.0
        %v1018 = vsel %vm978, %v998, 0.0
        %v1019 = vsel %vm979, %v901, 0.0
        %v1020 = vsel %vm980, %v999, 0.0
        %v1021 = vsel %vm981, %v902, 0.0
        %v1022 = vsel %vm982, %v1000, 0.0
        %v1023 = vsel %vm983, %v903, 0.0
        %v1024 = vsel %vm984, %v1001, 0.0
        %v1025 = vsel %vm985, %v904, 0.0
        %v1026 = vsel %vm986, %v1002, 0.0
        %vm1027 = vcmask 1043456
        %v1028 = vsel %vm1027, %v1011, 0.0
        %v1029 = vrot.slane %v1028, 4
        %v1030 = vadd.f32 %v1028, %v1029
        %v1031 = vrot.slane %v1030, 2
        %v1032 = vadd.f32 %v1030, %v1031
        %v1033 = vrot.slane %v1032, 1
        %v1034 = vadd.f32 %v1032, %v1033
        %v1035 = vsel %vm1027, %v1012, 0.0
        %v1036 = vrot.slane %v1035, 4
        %v1037 = vadd.f32 %v1035, %v1036
        %v1038 = vrot.slane %v1037, 2
        %v1039 = vadd.f32 %v1037, %v1038
        %v1040 = vrot.slane %v1039, 1
        %v1041 = vadd.f32 %v1039, %v1040
        %v1042 = vsel %vm1027, %v1013, 0.0
        %v1043 = vrot.slane %v1042, 4
        %v1044 = vadd.f32 %v1042, %v1043
        %v1045 = vrot.slane %v1044, 2
        %v1046 = vadd.f32 %v1044, %v1045
        %v1047 = vrot.slane %v1046, 1
        %v1048 = vadd.f32 %v1046, %v1047
        %v1049 = vsel %vm1027, %v1014, 0.0
        %v1050 = vrot.slane %v1049, 4
        %v1051 = vadd.f32 %v1049, %v1050
        %v1052 = vrot.slane %v1051, 2
        %v1053 = vadd.f32 %v1051, %v1052
        %v1054 = vrot.slane %v1053, 1
        %v1055 = vadd.f32 %v1053, %v1054
        %v1056 = vsel %vm1027, %v1015, 0.0
        %v1057 = vrot.slane %v1056, 4
        %v1058 = vadd.f32 %v1056, %v1057
        %v1059 = vrot.slane %v1058, 2
        %v1060 = vadd.f32 %v1058, %v1059
        %v1061 = vrot.slane %v1060, 1
        %v1062 = vadd.f32 %v1060, %v1061
        %v1063 = vsel %vm1027, %v1016, 0.0
        %v1064 = vrot.slane %v1063, 4
        %v1065 = vadd.f32 %v1063, %v1064
        %v1066 = vrot.slane %v1065, 2
        %v1067 = vadd.f32 %v1065, %v1066
        %v1068 = vrot.slane %v1067, 1
        %v1069 = vadd.f32 %v1067, %v1068
        %v1070 = vsel %vm1027, %v1017, 0.0
        %v1071 = vrot.slane %v1070, 4
        %v1072 = vadd.f32 %v1070, %v1071
        %v1073 = vrot.slane %v1072, 2
        %v1074 = vadd.f32 %v1072, %v1073
        %v1075 = vrot.slane %v1074, 1
        %v1076 = vadd.f32 %v1074, %v1075
        %v1077 = vsel %vm1027, %v1018, 0.0
        %v1078 = vrot.slane %v1077, 4
        %v1079 = vadd.f32 %v1077, %v1078
        %v1080 = vrot.slane %v1079, 2
        %v1081 = vadd.f32 %v1079, %v1080
        %v1082 = vrot.slane %v1081, 1
        %v1083 = vadd.f32 %v1081, %v1082
        %v1084 = vsel %vm1027, %v1019, 0.0
        %v1085 = vrot.slane %v1084, 4
        %v1086 = vadd.f32 %v1084, %v1085
        %v1087 = vrot.slane %v1086, 2
        %v1088 = vadd.f32 %v1086, %v1087
        %v1089 = vrot.slane %v1088, 1
        %v1090 = vadd.f32 %v1088, %v1089
        %v1091 = vsel %vm1027, %v1020, 0.0
        %v1092 = vrot.slane %v1091, 4
        %v1093 = vadd.f32 %v1091, %v1092
        %v1094 = vrot.slane %v1093, 2
        %v1095 = vadd.f32 %v1093, %v1094
        %v1096 = vrot.slane %v1095, 1
        %v1097 = vadd.f32 %v1095, %v1096
        %v1098 = vsel %vm1027, %v1021, 0.0
        %v1099 = vrot.slane %v1098, 4
        %v1100 = vadd.f32 %v1098, %v1099
        %v1101 = vrot.slane %v1100, 2
        %v1102 = vadd.f32 %v1100, %v1101
        %v1103 = vrot.slane %v1102, 1
        %v1104 = vadd.f32 %v1102, %v1103
        %v1105 = vsel %vm1027, %v1022, 0.0
        %v1106 = vrot.slane %v1105, 4
        %v1107 = vadd.f32 %v1105, %v1106
        %v1108 = vrot.slane %v1107, 2
        %v1109 = vadd.f32 %v1107, %v1108
        %v1110 = vrot.slane %v1109, 1
        %v1111 = vadd.f32 %v1109, %v1110
        %v1112 = vsel %vm1027, %v1023, 0.0
        %v1113 = vrot.slane %v1112, 4
        %v1114 = vadd.f32 %v1112, %v1113
        %v1115 = vrot.slane %v1114, 2
        %v1116 = vadd.f32 %v1114, %v1115
        %v1117 = vrot.slane %v1116, 1
        %v1118 = vadd.f32 %v1116, %v1117
        %v1119 = vsel %vm1027, %v1024, 0.0
        %v1120 = vrot.slane %v1119, 4
        %v1121 = vadd.f32 %v1119, %v1120
        %v1122 = vrot.slane %v1121, 2
        %v1123 = vadd.f32 %v1121, %v1122
        %v1124 = vrot.slane %v1123, 1
        %v1125 = vadd.f32 %v1123, %v1124
        %v1126 = vsel %vm1027, %v1025, 0.0
        %v1127 = vrot.slane %v1126, 4
        %v1128 = vadd.f32 %v1126, %v1127
        %v1129 = vrot.slane %v1128, 2
        %v1130 = vadd.f32 %v1128, %v1129
        %v1131 = vrot.slane %v1130, 1
        %v1132 = vadd.f32 %v1130, %v1131
        %v1133 = vsel %vm1027, %v1026, 0.0
        %v1134 = vrot.slane %v1133, 4
        %v1135 = vadd.f32 %v1133, %v1134
        %v1136 = vrot.slane %v1135, 2
        %v1137 = vadd.f32 %v1135, %v1136
        %v1138 = vrot.slane %v1137, 1
        %v1139 = vadd.f32 %v1137, %v1138
        %v1140 = vld [vmem:[#allocation4] sm:$0xff]
        %v1141 = vld [vmem:[#allocation4 + $0x8] sm:$0xff]
        %v1142 = vld [vmem:[#allocation4 + $0x10] sm:$0xff]
        %v1143 = vld [vmem:[#allocation4 + $0x18] sm:$0xff]
        %v1144 = vld [vmem:[#allocation4 + $0x20] sm:$0xff]
        %v1145 = vld [vmem:[#allocation4 + $0x28] sm:$0xff]
        %v1146 = vld [vmem:[#allocation4 + $0x30] sm:$0xff]
        %v1147 = vld [vmem:[#allocation4 + $0x38] sm:$0xff]
        %v1148 = vld [vmem:[#allocation4 + $0x40] sm:$0xff]
        %v1149 = vld [vmem:[#allocation4 + $0x48] sm:$0xff]
        %v1150 = vld [vmem:[#allocation4 + $0x50] sm:$0xff]
        %v1151 = vld [vmem:[#allocation4 + $0x58] sm:$0xff]
        %v1152 = vld [vmem:[#allocation4 + $0x60] sm:$0xff]
        %v1153 = vld [vmem:[#allocation4 + $0x68] sm:$0xff]
        %v1154 = vld [vmem:[#allocation4 + $0x70] sm:$0xff]
        %v1155 = vld [vmem:[#allocation4 + $0x78] sm:$0xff]
        %v1156 = vld [vmem:[#allocation4 + $0x80] sm:$0xff]
        %v1157 = vld [vmem:[#allocation4 + $0x88] sm:$0xff]
        %v1158 = vld [vmem:[#allocation4 + $0x90] sm:$0xff]
        %v1159 = vld [vmem:[#allocation4 + $0x98] sm:$0xff]
        %v1160 = vld [vmem:[#allocation4 + $0xa0] sm:$0xff]
        %v1161 = vld [vmem:[#allocation4 + $0xa8] sm:$0xff]
        %v1162 = vld [vmem:[#allocation4 + $0xb0] sm:$0xff]
        %v1163 = vld [vmem:[#allocation4 + $0xb8] sm:$0xff]
        %v1164 = vld [vmem:[#allocation4 + $0xc0] sm:$0xff]
        %v1165 = vld [vmem:[#allocation4 + $0xc8] sm:$0xff]
        %v1166 = vld [vmem:[#allocation4 + $0xd0] sm:$0xff]
        %v1167 = vld [vmem:[#allocation4 + $0xd8] sm:$0xff]
        %v1168 = vld [vmem:[#allocation4 + $0xe0] sm:$0xff]
        %v1169 = vld [vmem:[#allocation4 + $0xe8] sm:$0xff]
        %v1170 = vld [vmem:[#allocation4 + $0xf0] sm:$0xff]
        %v1171 = vld [vmem:[#allocation4 + $0xf8] sm:$0xff]
        %v1172 = vld [vmem:[#allocation4 + $0x100] sm:$0xf]
        %v1173 = vld [vmem:[#allocation4 + $0x108] sm:$0xf]
        %v1174 = vld [vmem:[#allocation4 + $0x110] sm:$0xf]
        %v1175 = vld [vmem:[#allocation4 + $0x118] sm:$0xf]
        %v1176 = vld [vmem:[#allocation4 + $0x120] sm:$0xf]
        %v1177 = vld [vmem:[#allocation4 + $0x128] sm:$0xf]
        %v1178 = vld [vmem:[#allocation4 + $0x130] sm:$0xf]
        %v1179 = vld [vmem:[#allocation4 + $0x138] sm:$0xf]
        %v1180 = vld [vmem:[#allocation4 + $0x140] sm:$0xf]
        %v1181 = vld [vmem:[#allocation4 + $0x148] sm:$0xf]
        %v1182 = vld [vmem:[#allocation4 + $0x150] sm:$0xf]
        %v1183 = vld [vmem:[#allocation4 + $0x158] sm:$0xf]
        %v1184 = vld [vmem:[#allocation4 + $0x160] sm:$0xf]
        %v1185 = vld [vmem:[#allocation4 + $0x168] sm:$0xf]
        %v1186 = vld [vmem:[#allocation4 + $0x170] sm:$0xf]
        %v1187 = vld [vmem:[#allocation4 + $0x178] sm:$0xf]
        %v1188 = vlaneseq
        %v1189 = vshrl.u32 %v1188, 7
        %v1190 = vadd.s32 %v1189, 8
        %v1191 = vadd.s32 %v1189, 16
        %v1192 = vadd.s32 %v1189, 1
        %v1193 = vadd.s32 %v1190, 1
        %v1194 = vadd.s32 %v1191, 1
        %v1195 = vlaneseq
        %v1196 = vshrl.u32 %v1195, 7
        %v1197 = vsub.s32 0, %v1196
        %v1198 = vrot.slane %v707, %v1197
        %v1199 = vlaneseq
        %v1200 = vshrl.u32 %v1199, 7
        %v1201 = vsub.s32 1, %v1200
        %v1202 = vrot.slane %v707, %v1201
        %v1203 = vlaneseq
        %v1204 = vshrl.u32 %v1203, 7
        %v1205 = vsub.s32 2, %v1204
        %v1206 = vrot.slane %v707, %v1205
        %v1207 = vlaneseq
        %v1208 = vshrl.u32 %v1207, 7
        %v1209 = vsub.s32 3, %v1208
        %v1210 = vrot.slane %v707, %v1209
        %v1211 = vlaneseq
        %v1212 = vshrl.u32 %v1211, 7
        %v1213 = vsub.s32 4, %v1212
        %v1214 = vrot.slane %v707, %v1213
        %v1215 = vlaneseq
        %v1216 = vshrl.u32 %v1215, 7
        %v1217 = vsub.s32 5, %v1216
        %v1218 = vrot.slane %v707, %v1217
        %v1219 = vlaneseq
        %v1220 = vshrl.u32 %v1219, 7
        %v1221 = vsub.s32 6, %v1220
        %v1222 = vrot.slane %v707, %v1221
        %v1223 = vlaneseq
        %v1224 = vshrl.u32 %v1223, 7
        %v1225 = vsub.s32 7, %v1224
        %v1226 = vrot.slane %v707, %v1225
        %v1227 = vlaneseq
        %v1228 = vshrl.u32 %v1227, 7
        %v1229 = vsub.s32 0, %v1228
        %v1230 = vrot.slane %v708, %v1229
        %v1231 = vlaneseq
        %v1232 = vshrl.u32 %v1231, 7
        %v1233 = vsub.s32 1, %v1232
        %v1234 = vrot.slane %v708, %v1233
        %v1235 = vlaneseq
        %v1236 = vshrl.u32 %v1235, 7
        %v1237 = vsub.s32 2, %v1236
        %v1238 = vrot.slane %v708, %v1237
        %v1239 = vlaneseq
        %v1240 = vshrl.u32 %v1239, 7
        %v1241 = vsub.s32 3, %v1240
        %v1242 = vrot.slane %v708, %v1241
        %v1243 = vlaneseq
        %v1244 = vshrl.u32 %v1243, 7
        %v1245 = vsub.s32 4, %v1244
        %v1246 = vrot.slane %v708, %v1245
        %v1247 = vlaneseq
        %v1248 = vshrl.u32 %v1247, 7
        %v1249 = vsub.s32 5, %v1248
        %v1250 = vrot.slane %v708, %v1249
        %v1251 = vlaneseq
        %v1252 = vshrl.u32 %v1251, 7
        %v1253 = vsub.s32 6, %v1252
        %v1254 = vrot.slane %v708, %v1253
        %v1255 = vlaneseq
        %v1256 = vshrl.u32 %v1255, 7
        %v1257 = vsub.s32 7, %v1256
        %v1258 = vrot.slane %v708, %v1257
        %vm1259 = vcmp.eq.s32.totalorder %v1198, %v1192
        %vm1260 = vcmp.eq.s32.totalorder %v1202, %v1192
        %vm1261 = vcmp.eq.s32.totalorder %v1206, %v1192
        %vm1262 = vcmp.eq.s32.totalorder %v1210, %v1192
        %vm1263 = vcmp.eq.s32.totalorder %v1214, %v1192
        %vm1264 = vcmp.eq.s32.totalorder %v1218, %v1192
        %vm1265 = vcmp.eq.s32.totalorder %v1222, %v1192
        %vm1266 = vcmp.eq.s32.totalorder %v1226, %v1192
        %vm1267 = vcmp.eq.s32.totalorder %v1230, %v1192
        %vm1268 = vcmp.eq.s32.totalorder %v1234, %v1192
        %vm1269 = vcmp.eq.s32.totalorder %v1238, %v1192
        %vm1270 = vcmp.eq.s32.totalorder %v1242, %v1192
        %vm1271 = vcmp.eq.s32.totalorder %v1246, %v1192
        %vm1272 = vcmp.eq.s32.totalorder %v1250, %v1192
        %vm1273 = vcmp.eq.s32.totalorder %v1254, %v1192
        %vm1274 = vcmp.eq.s32.totalorder %v1258, %v1192
        %vm1275 = vcmp.eq.s32.totalorder %v1198, %v1193
        %vm1276 = vcmp.eq.s32.totalorder %v1202, %v1193
        %vm1277 = vcmp.eq.s32.totalorder %v1206, %v1193
        %vm1278 = vcmp.eq.s32.totalorder %v1210, %v1193
        %vm1279 = vcmp.eq.s32.totalorder %v1214, %v1193
        %vm1280 = vcmp.eq.s32.totalorder %v1218, %v1193
        %vm1281 = vcmp.eq.s32.totalorder %v1222, %v1193
        %vm1282 = vcmp.eq.s32.totalorder %v1226, %v1193
        %vm1283 = vcmp.eq.s32.totalorder %v1230, %v1193
        %vm1284 = vcmp.eq.s32.totalorder %v1234, %v1193
        %vm1285 = vcmp.eq.s32.totalorder %v1238, %v1193
        %vm1286 = vcmp.eq.s32.totalorder %v1242, %v1193
        %vm1287 = vcmp.eq.s32.totalorder %v1246, %v1193
        %vm1288 = vcmp.eq.s32.totalorder %v1250, %v1193
        %vm1289 = vcmp.eq.s32.totalorder %v1254, %v1193
        %vm1290 = vcmp.eq.s32.totalorder %v1258, %v1193
        %vm1291 = vcmp.eq.s32.totalorder %v1198, %v1194
        %vm1292 = vcmp.eq.s32.totalorder %v1202, %v1194
        %vm1293 = vcmp.eq.s32.totalorder %v1206, %v1194
        %vm1294 = vcmp.eq.s32.totalorder %v1210, %v1194
        %vm1295 = vcmp.eq.s32.totalorder %v1214, %v1194
        %vm1296 = vcmp.eq.s32.totalorder %v1218, %v1194
        %vm1297 = vcmp.eq.s32.totalorder %v1222, %v1194
        %vm1298 = vcmp.eq.s32.totalorder %v1226, %v1194
        %vm1299 = vcmp.eq.s32.totalorder %v1230, %v1194
        %vm1300 = vcmp.eq.s32.totalorder %v1234, %v1194
        %vm1301 = vcmp.eq.s32.totalorder %v1238, %v1194
        %vm1302 = vcmp.eq.s32.totalorder %v1242, %v1194
        %vm1303 = vcmp.eq.s32.totalorder %v1246, %v1194
        %vm1304 = vcmp.eq.s32.totalorder %v1250, %v1194
        %vm1305 = vcmp.eq.s32.totalorder %v1254, %v1194
        %vm1306 = vcmp.eq.s32.totalorder %v1258, %v1194
        %v1307 = vadd.f32 %v1140, %v1140
        %v1308 = vadd.f32 %v1141, %v1141
        %v1309 = vadd.f32 %v1142, %v1142
        %v1310 = vadd.f32 %v1143, %v1143
        %v1311 = vadd.f32 %v1144, %v1144
        %v1312 = vadd.f32 %v1145, %v1145
        %v1313 = vadd.f32 %v1146, %v1146
        %v1314 = vadd.f32 %v1147, %v1147
        %v1315 = vadd.f32 %v1148, %v1148
        %v1316 = vadd.f32 %v1149, %v1149
        %v1317 = vadd.f32 %v1150, %v1150
        %v1318 = vadd.f32 %v1151, %v1151
        %v1319 = vadd.f32 %v1152, %v1152
        %v1320 = vadd.f32 %v1153, %v1153
        %v1321 = vadd.f32 %v1154, %v1154
        %v1322 = vadd.f32 %v1155, %v1155
        %v1323 = vadd.f32 %v1156, %v1156
        %v1324 = vadd.f32 %v1157, %v1157
        %v1325 = vadd.f32 %v1158, %v1158
        %v1326 = vadd.f32 %v1159, %v1159
        %v1327 = vadd.f32 %v1160, %v1160
        %v1328 = vadd.f32 %v1161, %v1161
        %v1329 = vadd.f32 %v1162, %v1162
        %v1330 = vadd.f32 %v1163, %v1163
        %v1331 = vadd.f32 %v1164, %v1164
        %v1332 = vadd.f32 %v1165, %v1165
        %v1333 = vadd.f32 %v1166, %v1166
        %v1334 = vadd.f32 %v1167, %v1167
        %v1335 = vadd.f32 %v1168, %v1168
        %v1336 = vadd.f32 %v1169, %v1169
        %v1337 = vadd.f32 %v1170, %v1170
        %v1338 = vadd.f32 %v1171, %v1171
        %v1339 = vadd.f32 %v1172, %v1172
        %v1340 = vadd.f32 %v1173, %v1173
        %v1341 = vadd.f32 %v1174, %v1174
        %v1342 = vadd.f32 %v1175, %v1175
        %v1343 = vadd.f32 %v1176, %v1176
        %v1344 = vadd.f32 %v1177, %v1177
        %v1345 = vadd.f32 %v1178, %v1178
        %v1346 = vadd.f32 %v1179, %v1179
        %v1347 = vadd.f32 %v1180, %v1180
        %v1348 = vadd.f32 %v1181, %v1181
        %v1349 = vadd.f32 %v1182, %v1182
        %v1350 = vadd.f32 %v1183, %v1183
        %v1351 = vadd.f32 %v1184, %v1184
        %v1352 = vadd.f32 %v1185, %v1185
        %v1353 = vadd.f32 %v1186, %v1186
        %v1354 = vadd.f32 %v1187, %v1187
        %v1355 = vadd.f32 %v1307, 1.0
        %v1356 = vadd.f32 %v1308, 1.0
        %v1357 = vadd.f32 %v1309, 1.0
        %v1358 = vadd.f32 %v1310, 1.0
        %v1359 = vadd.f32 %v1311, 1.0
        %v1360 = vadd.f32 %v1312, 1.0
        %v1361 = vadd.f32 %v1313, 1.0
        %v1362 = vadd.f32 %v1314, 1.0
        %v1363 = vadd.f32 %v1315, 1.0
        %v1364 = vadd.f32 %v1316, 1.0
        %v1365 = vadd.f32 %v1317, 1.0
        %v1366 = vadd.f32 %v1318, 1.0
        %v1367 = vadd.f32 %v1319, 1.0
        %v1368 = vadd.f32 %v1320, 1.0
        %v1369 = vadd.f32 %v1321, 1.0
        %v1370 = vadd.f32 %v1322, 1.0
        %v1371 = vadd.f32 %v1323, 1.0
        %v1372 = vadd.f32 %v1324, 1.0
        %v1373 = vadd.f32 %v1325, 1.0
        %v1374 = vadd.f32 %v1326, 1.0
        %v1375 = vadd.f32 %v1327, 1.0
        %v1376 = vadd.f32 %v1328, 1.0
        %v1377 = vadd.f32 %v1329, 1.0
        %v1378 = vadd.f32 %v1330, 1.0
        %v1379 = vadd.f32 %v1331, 1.0
        %v1380 = vadd.f32 %v1332, 1.0
        %v1381 = vadd.f32 %v1333, 1.0
        %v1382 = vadd.f32 %v1334, 1.0
        %v1383 = vadd.f32 %v1335, 1.0
        %v1384 = vadd.f32 %v1336, 1.0
        %v1385 = vadd.f32 %v1337, 1.0
        %v1386 = vadd.f32 %v1338, 1.0
        %v1387 = vadd.f32 %v1339, 1.0
        %v1388 = vadd.f32 %v1340, 1.0
        %v1389 = vadd.f32 %v1341, 1.0
        %v1390 = vadd.f32 %v1342, 1.0
        %v1391 = vadd.f32 %v1343, 1.0
        %v1392 = vadd.f32 %v1344, 1.0
        %v1393 = vadd.f32 %v1345, 1.0
        %v1394 = vadd.f32 %v1346, 1.0
        %v1395 = vadd.f32 %v1347, 1.0
        %v1396 = vadd.f32 %v1348, 1.0
        %v1397 = vadd.f32 %v1349, 1.0
        %v1398 = vadd.f32 %v1350, 1.0
        %v1399 = vadd.f32 %v1351, 1.0
        %v1400 = vadd.f32 %v1352, 1.0
        %v1401 = vadd.f32 %v1353, 1.0
        %v1402 = vadd.f32 %v1354, 1.0
        %v1403 = vsub.f32 1.0, %v1307
        %v1404 = vsub.f32 1.0, %v1308
        %v1405 = vsub.f32 1.0, %v1309
        %v1406 = vsub.f32 1.0, %v1310
        %v1407 = vsub.f32 1.0, %v1311
        %v1408 = vsub.f32 1.0, %v1312
        %v1409 = vsub.f32 1.0, %v1313
        %v1410 = vsub.f32 1.0, %v1314
        %v1411 = vsub.f32 1.0, %v1315
        %v1412 = vsub.f32 1.0, %v1316
        %v1413 = vsub.f32 1.0, %v1317
        %v1414 = vsub.f32 1.0, %v1318
        %v1415 = vsub.f32 1.0, %v1319
        %v1416 = vsub.f32 1.0, %v1320
        %v1417 = vsub.f32 1.0, %v1321
        %v1418 = vsub.f32 1.0, %v1322
        %v1419 = vsub.f32 1.0, %v1323
        %v1420 = vsub.f32 1.0, %v1324
        %v1421 = vsub.f32 1.0, %v1325
        %v1422 = vsub.f32 1.0, %v1326
        %v1423 = vsub.f32 1.0, %v1327
        %v1424 = vsub.f32 1.0, %v1328
        %v1425 = vsub.f32 1.0, %v1329
        %v1426 = vsub.f32 1.0, %v1330
        %v1427 = vsub.f32 1.0, %v1331
        %v1428 = vsub.f32 1.0, %v1332
        %v1429 = vsub.f32 1.0, %v1333
        %v1430 = vsub.f32 1.0, %v1334
        %v1431 = vsub.f32 1.0, %v1335
        %v1432 = vsub.f32 1.0, %v1336
        %v1433 = vsub.f32 1.0, %v1337
        %v1434 = vsub.f32 1.0, %v1338
        %v1435 = vsub.f32 1.0, %v1339
        %v1436 = vsub.f32 1.0, %v1340
        %v1437 = vsub.f32 1.0, %v1341
        %v1438 = vsub.f32 1.0, %v1342
        %v1439 = vsub.f32 1.0, %v1343
        %v1440 = vsub.f32 1.0, %v1344
        %v1441 = vsub.f32 1.0, %v1345
        %v1442 = vsub.f32 1.0, %v1346
        %v1443 = vsub.f32 1.0, %v1347
        %v1444 = vsub.f32 1.0, %v1348
        %v1445 = vsub.f32 1.0, %v1349
        %v1446 = vsub.f32 1.0, %v1350
        %v1447 = vsub.f32 1.0, %v1351
        %v1448 = vsub.f32 1.0, %v1352
        %v1449 = vsub.f32 1.0, %v1353
        %v1450 = vsub.f32 1.0, %v1354
        %v1451 = vsel %vm1259, %v1355, %v1403
        %v1452 = vsel %vm1260, %v1356, %v1404
        %v1453 = vsel %vm1261, %v1357, %v1405
        %v1454 = vsel %vm1262, %v1358, %v1406
        %v1455 = vsel %vm1263, %v1359, %v1407
        %v1456 = vsel %vm1264, %v1360, %v1408
        %v1457 = vsel %vm1265, %v1361, %v1409
        %v1458 = vsel %vm1266, %v1362, %v1410
        %v1459 = vsel %vm1267, %v1363, %v1411
        %v1460 = vsel %vm1268, %v1364, %v1412
        %v1461 = vsel %vm1269, %v1365, %v1413
        %v1462 = vsel %vm1270, %v1366, %v1414
        %v1463 = vsel %vm1271, %v1367, %v1415
        %v1464 = vsel %vm1272, %v1368, %v1416
        %v1465 = vsel %vm1273, %v1369, %v1417
        %v1466 = vsel %vm1274, %v1370, %v1418
        %v1467 = vsel %vm1275, %v1371, %v1419
        %v1468 = vsel %vm1276, %v1372, %v1420
        %v1469 = vsel %vm1277, %v1373, %v1421
        %v1470 = vsel %vm1278, %v1374, %v1422
        %v1471 = vsel %vm1279, %v1375, %v1423
        %v1472 = vsel %vm1280, %v1376, %v1424
        %v1473 = vsel %vm1281, %v1377, %v1425
        %v1474 = vsel %vm1282, %v1378, %v1426
        %v1475 = vsel %vm1283, %v1379, %v1427
        %v1476 = vsel %vm1284, %v1380, %v1428
        %v1477 = vsel %vm1285, %v1381, %v1429
        %v1478 = vsel %vm1286, %v1382, %v1430
        %v1479 = vsel %vm1287, %v1383, %v1431
        %v1480 = vsel %vm1288, %v1384, %v1432
        %v1481 = vsel %vm1289, %v1385, %v1433
        %v1482 = vsel %vm1290, %v1386, %v1434
        %v1483 = vsel %vm1291, %v1387, %v1435
        %v1484 = vsel %vm1292, %v1388, %v1436
        %v1485 = vsel %vm1293, %v1389, %v1437
        %v1486 = vsel %vm1294, %v1390, %v1438
        %v1487 = vsel %vm1295, %v1391, %v1439
        %v1488 = vsel %vm1296, %v1392, %v1440
        %v1489 = vsel %vm1297, %v1393, %v1441
        %v1490 = vsel %vm1298, %v1394, %v1442
        %v1491 = vsel %vm1299, %v1395, %v1443
        %v1492 = vsel %vm1300, %v1396, %v1444
        %v1493 = vsel %vm1301, %v1397, %v1445
        %v1494 = vsel %vm1302, %v1398, %v1446
        %v1495 = vsel %vm1303, %v1399, %v1447
        %v1496 = vsel %vm1304, %v1400, %v1448
        %v1497 = vsel %vm1305, %v1401, %v1449
        %v1498 = vsel %vm1306, %v1402, %v1450
        %v1499 = vmin.f32 %v1451, 0.0
        %v1500 = vmin.f32 %v1452, 0.0
        %v1501 = vmin.f32 %v1453, 0.0
        %v1502 = vmin.f32 %v1454, 0.0
        %v1503 = vmin.f32 %v1455, 0.0
        %v1504 = vmin.f32 %v1456, 0.0
        %v1505 = vmin.f32 %v1457, 0.0
        %v1506 = vmin.f32 %v1458, 0.0
        %v1507 = vmin.f32 %v1459, 0.0
        %v1508 = vmin.f32 %v1460, 0.0
        %v1509 = vmin.f32 %v1461, 0.0
        %v1510 = vmin.f32 %v1462, 0.0
        %v1511 = vmin.f32 %v1463, 0.0
        %v1512 = vmin.f32 %v1464, 0.0
        %v1513 = vmin.f32 %v1465, 0.0
        %v1514 = vmin.f32 %v1466, 0.0
        %v1515 = vmin.f32 %v1467, 0.0
        %v1516 = vmin.f32 %v1468, 0.0
        %v1517 = vmin.f32 %v1469, 0.0
        %v1518 = vmin.f32 %v1470, 0.0
        %v1519 = vmin.f32 %v1471, 0.0
        %v1520 = vmin.f32 %v1472, 0.0
        %v1521 = vmin.f32 %v1473, 0.0
        %v1522 = vmin.f32 %v1474, 0.0
        %v1523 = vmin.f32 %v1475, 0.0
        %v1524 = vmin.f32 %v1476, 0.0
        %v1525 = vmin.f32 %v1477, 0.0
        %v1526 = vmin.f32 %v1478, 0.0
        %v1527 = vmin.f32 %v1479, 0.0
        %v1528 = vmin.f32 %v1480, 0.0
        %v1529 = vmin.f32 %v1481, 0.0
        %v1530 = vmin.f32 %v1482, 0.0
        %v1531 = vmin.f32 %v1483, 0.0
        %v1532 = vmin.f32 %v1484, 0.0
        %v1533 = vmin.f32 %v1485, 0.0
        %v1534 = vmin.f32 %v1486, 0.0
        %v1535 = vmin.f32 %v1487, 0.0
        %v1536 = vmin.f32 %v1488, 0.0
        %v1537 = vmin.f32 %v1489, 0.0
        %v1538 = vmin.f32 %v1490, 0.0
        %v1539 = vmin.f32 %v1491, 0.0
        %v1540 = vmin.f32 %v1492, 0.0
        %v1541 = vmin.f32 %v1493, 0.0
        %v1542 = vmin.f32 %v1494, 0.0
        %v1543 = vmin.f32 %v1495, 0.0
        %v1544 = vmin.f32 %v1496, 0.0
        %v1545 = vmin.f32 %v1497, 0.0
        %v1546 = vmin.f32 %v1498, 0.0
        %v1547 = vand.u32 2147483647, %v1451
        %v1548 = vand.u32 2147483647, %v1452
        %v1549 = vand.u32 2147483647, %v1453
        %v1550 = vand.u32 2147483647, %v1454
        %v1551 = vand.u32 2147483647, %v1455
        %v1552 = vand.u32 2147483647, %v1456
        %v1553 = vand.u32 2147483647, %v1457
        %v1554 = vand.u32 2147483647, %v1458
        %v1555 = vand.u32 2147483647, %v1459
        %v1556 = vand.u32 2147483647, %v1460
        %v1557 = vand.u32 2147483647, %v1461
        %v1558 = vand.u32 2147483647, %v1462
        %v1559 = vand.u32 2147483647, %v1463
        %v1560 = vand.u32 2147483647, %v1464
        %v1561 = vand.u32 2147483647, %v1465
        %v1562 = vand.u32 2147483647, %v1466
        %v1563 = vand.u32 2147483647, %v1467
        %v1564 = vand.u32 2147483647, %v1468
        %v1565 = vand.u32 2147483647, %v1469
        %v1566 = vand.u32 2147483647, %v1470
        %v1567 = vand.u32 2147483647, %v1471
        %v1568 = vand.u32 2147483647, %v1472
        %v1569 = vand.u32 2147483647, %v1473
        %v1570 = vand.u32 2147483647, %v1474
        %v1571 = vand.u32 2147483647, %v1475
        %v1572 = vand.u32 2147483647, %v1476
        %v1573 = vand.u32 2147483647, %v1477
        %v1574 = vand.u32 2147483647, %v1478
        %v1575 = vand.u32 2147483647, %v1479
        %v1576 = vand.u32 2147483647, %v1480
        %v1577 = vand.u32 2147483647, %v1481
        %v1578 = vand.u32 2147483647, %v1482
        %v1579 = vand.u32 2147483647, %v1483
        %v1580 = vand.u32 2147483647, %v1484
        %v1581 = vand.u32 2147483647, %v1485
        %v1582 = vand.u32 2147483647, %v1486
        %v1583 = vand.u32 2147483647, %v1487
        %v1584 = vand.u32 2147483647, %v1488
        %v1585 = vand.u32 2147483647, %v1489
        %v1586 = vand.u32 2147483647, %v1490
        %v1587 = vand.u32 2147483647, %v1491
        %v1588 = vand.u32 2147483647, %v1492
        %v1589 = vand.u32 2147483647, %v1493
        %v1590 = vand.u32 2147483647, %v1494
        %v1591 = vand.u32 2147483647, %v1495
        %v1592 = vand.u32 2147483647, %v1496
        %v1593 = vand.u32 2147483647, %v1497
        %v1594 = vand.u32 2147483647, %v1498
        %v1595 = vsub.f32 0.0, %v1547
        %v1596 = vsub.f32 0.0, %v1548
        %v1597 = vsub.f32 0.0, %v1549
        %v1598 = vsub.f32 0.0, %v1550
        %v1599 = vsub.f32 0.0, %v1551
        %v1600 = vsub.f32 0.0, %v1552
        %v1601 = vsub.f32 0.0, %v1553
        %v1602 = vsub.f32 0.0, %v1554
        %v1603 = vsub.f32 0.0, %v1555
        %v1604 = vsub.f32 0.0, %v1556
        %v1605 = vsub.f32 0.0, %v1557
        %v1606 = vsub.f32 0.0, %v1558
        %v1607 = vsub.f32 0.0, %v1559
        %v1608 = vsub.f32 0.0, %v1560
        %v1609 = vsub.f32 0.0, %v1561
        %v1610 = vsub.f32 0.0, %v1562
        %v1611 = vsub.f32 0.0, %v1563
        %v1612 = vsub.f32 0.0, %v1564
        %v1613 = vsub.f32 0.0, %v1565
        %v1614 = vsub.f32 0.0, %v1566
        %v1615 = vsub.f32 0.0, %v1567
        %v1616 = vsub.f32 0.0, %v1568
        %v1617 = vsub.f32 0.0, %v1569
        %v1618 = vsub.f32 0.0, %v1570
        %v1619 = vsub.f32 0.0, %v1571
        %v1620 = vsub.f32 0.0, %v1572
        %v1621 = vsub.f32 0.0, %v1573
        %v1622 = vsub.f32 0.0, %v1574
        %v1623 = vsub.f32 0.0, %v1575
        %v1624 = vsub.f32 0.0, %v1576
        %v1625 = vsub.f32 0.0, %v1577
        %v1626 = vsub.f32 0.0, %v1578
        %v1627 = vsub.f32 0.0, %v1579
        %v1628 = vsub.f32 0.0, %v1580
        %v1629 = vsub.f32 0.0, %v1581
        %v1630 = vsub.f32 0.0, %v1582
        %v1631 = vsub.f32 0.0, %v1583
        %v1632 = vsub.f32 0.0, %v1584
        %v1633 = vsub.f32 0.0, %v1585
        %v1634 = vsub.f32 0.0, %v1586
        %v1635 = vsub.f32 0.0, %v1587
        %v1636 = vsub.f32 0.0, %v1588
        %v1637 = vsub.f32 0.0, %v1589
        %v1638 = vsub.f32 0.0, %v1590
        %v1639 = vsub.f32 0.0, %v1591
        %v1640 = vsub.f32 0.0, %v1592
        %v1641 = vsub.f32 0.0, %v1593
        %v1642 = vsub.f32 0.0, %v1594
        %v1643 = vmul.f32 %v1595, 1.442695
        %v1644 = vpow.pop %v1643
        %v1645 = vmul.f32 %v1596, 1.442695
        %v1646 = vpow.pop %v1645
        %v1647 = vmul.f32 %v1597, 1.442695
        %v1648 = vpow.pop %v1647
        %v1649 = vmul.f32 %v1598, 1.442695
        %v1650 = vpow.pop %v1649
        %v1651 = vmul.f32 %v1599, 1.442695
        %v1652 = vpow.pop %v1651
        %v1653 = vmul.f32 %v1600, 1.442695
        %v1654 = vpow.pop %v1653
        %v1655 = vmul.f32 %v1601, 1.442695
        %v1656 = vpow.pop %v1655
        %v1657 = vmul.f32 %v1602, 1.442695
        %v1658 = vpow.pop %v1657
        %v1659 = vmul.f32 %v1603, 1.442695
        %v1660 = vpow.pop %v1659
        %v1661 = vmul.f32 %v1604, 1.442695
        %v1662 = vpow.pop %v1661
        %v1663 = vmul.f32 %v1605, 1.442695
        %v1664 = vpow.pop %v1663
        %v1665 = vmul.f32 %v1606, 1.442695
        %v1666 = vpow.pop %v1665
        %v1667 = vmul.f32 %v1607, 1.442695
        %v1668 = vpow.pop %v1667
        %v1669 = vmul.f32 %v1608, 1.442695
        %v1670 = vpow.pop %v1669
        %v1671 = vmul.f32 %v1609, 1.442695
        %v1672 = vpow.pop %v1671
        %v1673 = vmul.f32 %v1610, 1.442695
        %v1674 = vpow.pop %v1673
        %v1675 = vmul.f32 %v1611, 1.442695
        %v1676 = vpow.pop %v1675
        %v1677 = vmul.f32 %v1612, 1.442695
        %v1678 = vpow.pop %v1677
        %v1679 = vmul.f32 %v1613, 1.442695
        %v1680 = vpow.pop %v1679
        %v1681 = vmul.f32 %v1614, 1.442695
        %v1682 = vpow.pop %v1681
        %v1683 = vmul.f32 %v1615, 1.442695
        %v1684 = vpow.pop %v1683
        %v1685 = vmul.f32 %v1616, 1.442695
        %v1686 = vpow.pop %v1685
        %v1687 = vmul.f32 %v1617, 1.442695
        %v1688 = vpow.pop %v1687
        %v1689 = vmul.f32 %v1618, 1.442695
        %v1690 = vpow.pop %v1689
        %v1691 = vmul.f32 %v1619, 1.442695
        %v1692 = vpow.pop %v1691
        %v1693 = vmul.f32 %v1620, 1.442695
        %v1694 = vpow.pop %v1693
        %v1695 = vmul.f32 %v1621, 1.442695
        %v1696 = vpow.pop %v1695
        %v1697 = vmul.f32 %v1622, 1.442695
        %v1698 = vpow.pop %v1697
        %v1699 = vmul.f32 %v1623, 1.442695
        %v1700 = vpow.pop %v1699
        %v1701 = vmul.f32 %v1624, 1.442695
        %v1702 = vpow.pop %v1701
        %v1703 = vmul.f32 %v1625, 1.442695
        %v1704 = vpow.pop %v1703
        %v1705 = vmul.f32 %v1626, 1.442695
        %v1706 = vpow.pop %v1705
        %v1707 = vmul.f32 %v1627, 1.442695
        %v1708 = vpow.pop %v1707
        %v1709 = vmul.f32 %v1628, 1.442695
        %v1710 = vpow.pop %v1709
        %v1711 = vmul.f32 %v1629, 1.442695
        %v1712 = vpow.pop %v1711
        %v1713 = vmul.f32 %v1630, 1.442695
        %v1714 = vpow.pop %v1713
        %v1715 = vmul.f32 %v1631, 1.442695
        %v1716 = vpow.pop %v1715
        %v1717 = vmul.f32 %v1632, 1.442695
        %v1718 = vpow.pop %v1717
        %v1719 = vmul.f32 %v1633, 1.442695
        %v1720 = vpow.pop %v1719
        %v1721 = vmul.f32 %v1634, 1.442695
        %v1722 = vpow.pop %v1721
        %v1723 = vmul.f32 %v1635, 1.442695
        %v1724 = vpow.pop %v1723
        %v1725 = vmul.f32 %v1636, 1.442695
        %v1726 = vpow.pop %v1725
        %v1727 = vmul.f32 %v1637, 1.442695
        %v1728 = vpow.pop %v1727
        %v1729 = vmul.f32 %v1638, 1.442695
        %v1730 = vpow.pop %v1729
        %v1731 = vmul.f32 %v1639, 1.442695
        %v1732 = vpow.pop %v1731
        %v1733 = vmul.f32 %v1640, 1.442695
        %v1734 = vpow.pop %v1733
        %v1735 = vmul.f32 %v1641, 1.442695
        %v1736 = vpow.pop %v1735
        %v1737 = vmul.f32 %v1642, 1.442695
        %v1738 = vpow.pop %v1737
        %v1739 = vadd.f32 %v1644, 1.0
        %v1740 = vadd.f32 %v1646, 1.0
        %v1741 = vadd.f32 %v1648, 1.0
        %v1742 = vadd.f32 %v1650, 1.0
        %v1743 = vadd.f32 %v1652, 1.0
        %v1744 = vadd.f32 %v1654, 1.0
        %v1745 = vadd.f32 %v1656, 1.0
        %v1746 = vadd.f32 %v1658, 1.0
        %v1747 = vadd.f32 %v1660, 1.0
        %v1748 = vadd.f32 %v1662, 1.0
        %v1749 = vadd.f32 %v1664, 1.0
        %v1750 = vadd.f32 %v1666, 1.0
        %v1751 = vadd.f32 %v1668, 1.0
        %v1752 = vadd.f32 %v1670, 1.0
        %v1753 = vadd.f32 %v1672, 1.0
        %v1754 = vadd.f32 %v1674, 1.0
        %v1755 = vadd.f32 %v1676, 1.0
        %v1756 = vadd.f32 %v1678, 1.0
        %v1757 = vadd.f32 %v1680, 1.0
        %v1758 = vadd.f32 %v1682, 1.0
        %v1759 = vadd.f32 %v1684, 1.0
        %v1760 = vadd.f32 %v1686, 1.0
        %v1761 = vadd.f32 %v1688, 1.0
        %v1762 = vadd.f32 %v1690, 1.0
        %v1763 = vadd.f32 %v1692, 1.0
        %v1764 = vadd.f32 %v1694, 1.0
        %v1765 = vadd.f32 %v1696, 1.0
        %v1766 = vadd.f32 %v1698, 1.0
        %v1767 = vadd.f32 %v1700, 1.0
        %v1768 = vadd.f32 %v1702, 1.0
        %v1769 = vadd.f32 %v1704, 1.0
        %v1770 = vadd.f32 %v1706, 1.0
        %v1771 = vadd.f32 %v1708, 1.0
        %v1772 = vadd.f32 %v1710, 1.0
        %v1773 = vadd.f32 %v1712, 1.0
        %v1774 = vadd.f32 %v1714, 1.0
        %v1775 = vadd.f32 %v1716, 1.0
        %v1776 = vadd.f32 %v1718, 1.0
        %v1777 = vadd.f32 %v1720, 1.0
        %v1778 = vadd.f32 %v1722, 1.0
        %v1779 = vadd.f32 %v1724, 1.0
        %v1780 = vadd.f32 %v1726, 1.0
        %v1781 = vadd.f32 %v1728, 1.0
        %v1782 = vadd.f32 %v1730, 1.0
        %v1783 = vadd.f32 %v1732, 1.0
        %v1784 = vadd.f32 %v1734, 1.0
        %v1785 = vadd.f32 %v1736, 1.0
        %v1786 = vadd.f32 %v1738, 1.0
        %v1787 = vlog2.pop %v1739
        %v1788 = vmul.f32 %v1787, 0.6931472
        %v1789 = vlog2.pop %v1740
        %v1790 = vmul.f32 %v1789, 0.6931472
        %v1791 = vlog2.pop %v1741
        %v1792 = vmul.f32 %v1791, 0.6931472
        %v1793 = vlog2.pop %v1742
        %v1794 = vmul.f32 %v1793, 0.6931472
        %v1795 = vlog2.pop %v1743
        %v1796 = vmul.f32 %v1795, 0.6931472
        %v1797 = vlog2.pop %v1744
        %v1798 = vmul.f32 %v1797, 0.6931472
        %v1799 = vlog2.pop %v1745
        %v1800 = vmul.f32 %v1799, 0.6931472
        %v1801 = vlog2.pop %v1746
        %v1802 = vmul.f32 %v1801, 0.6931472
        %v1803 = vlog2.pop %v1747
        %v1804 = vmul.f32 %v1803, 0.6931472
        %v1805 = vlog2.pop %v1748
        %v1806 = vmul.f32 %v1805, 0.6931472
        %v1807 = vlog2.pop %v1749
        %v1808 = vmul.f32 %v1807, 0.6931472
        %v1809 = vlog2.pop %v1750
        %v1810 = vmul.f32 %v1809, 0.6931472
        %v1811 = vlog2.pop %v1751
        %v1812 = vmul.f32 %v1811, 0.6931472
        %v1813 = vlog2.pop %v1752
        %v1814 = vmul.f32 %v1813, 0.6931472
        %v1815 = vlog2.pop %v1753
        %v1816 = vmul.f32 %v1815, 0.6931472
        %v1817 = vlog2.pop %v1754
        %v1818 = vmul.f32 %v1817, 0.6931472
        %v1819 = vlog2.pop %v1755
        %v1820 = vmul.f32 %v1819, 0.6931472
        %v1821 = vlog2.pop %v1756
        %v1822 = vmul.f32 %v1821, 0.6931472
        %v1823 = vlog2.pop %v1757
        %v1824 = vmul.f32 %v1823, 0.6931472
        %v1825 = vlog2.pop %v1758
        %v1826 = vmul.f32 %v1825, 0.6931472
        %v1827 = vlog2.pop %v1759
        %v1828 = vmul.f32 %v1827, 0.6931472
        %v1829 = vlog2.pop %v1760
        %v1830 = vmul.f32 %v1829, 0.6931472
        %v1831 = vlog2.pop %v1761
        %v1832 = vmul.f32 %v1831, 0.6931472
        %v1833 = vlog2.pop %v1762
        %v1834 = vmul.f32 %v1833, 0.6931472
        %v1835 = vlog2.pop %v1763
        %v1836 = vmul.f32 %v1835, 0.6931472
        %v1837 = vlog2.pop %v1764
        %v1838 = vmul.f32 %v1837, 0.6931472
        %v1839 = vlog2.pop %v1765
        %v1840 = vmul.f32 %v1839, 0.6931472
        %v1841 = vlog2.pop %v1766
        %v1842 = vmul.f32 %v1841, 0.6931472
        %v1843 = vlog2.pop %v1767
        %v1844 = vmul.f32 %v1843, 0.6931472
        %v1845 = vlog2.pop %v1768
        %v1846 = vmul.f32 %v1845, 0.6931472
        %v1847 = vlog2.pop %v1769
        %v1848 = vmul.f32 %v1847, 0.6931472
        %v1849 = vlog2.pop %v1770
        %v1850 = vmul.f32 %v1849, 0.6931472
        %v1851 = vlog2.pop %v1771
        %v1852 = vmul.f32 %v1851, 0.6931472
        %v1853 = vlog2.pop %v1772
        %v1854 = vmul.f32 %v1853, 0.6931472
        %v1855 = vlog2.pop %v1773
        %v1856 = vmul.f32 %v1855, 0.6931472
        %v1857 = vlog2.pop %v1774
        %v1858 = vmul.f32 %v1857, 0.6931472
        %v1859 = vlog2.pop %v1775
        %v1860 = vmul.f32 %v1859, 0.6931472
        %v1861 = vlog2.pop %v1776
        %v1862 = vmul.f32 %v1861, 0.6931472
        %v1863 = vlog2.pop %v1777
        %v1864 = vmul.f32 %v1863, 0.6931472
        %v1865 = vlog2.pop %v1778
        %v1866 = vmul.f32 %v1865, 0.6931472
        %v1867 = vlog2.pop %v1779
        %v1868 = vmul.f32 %v1867, 0.6931472
        %v1869 = vlog2.pop %v1780
        %v1870 = vmul.f32 %v1869, 0.6931472
        %v1871 = vlog2.pop %v1781
        %v1872 = vmul.f32 %v1871, 0.6931472
        %v1873 = vlog2.pop %v1782
        %v1874 = vmul.f32 %v1873, 0.6931472
        %v1875 = vlog2.pop %v1783
        %v1876 = vmul.f32 %v1875, 0.6931472
        %v1877 = vlog2.pop %v1784
        %v1878 = vmul.f32 %v1877, 0.6931472
        %v1879 = vlog2.pop %v1785
        %v1880 = vmul.f32 %v1879, 0.6931472
        %v1881 = vlog2.pop %v1786
        %v1882 = vmul.f32 %v1881, 0.6931472
        %v1883 = vsub.f32 %v1499, %v1788
        %v1884 = vsub.f32 %v1500, %v1790
        %v1885 = vsub.f32 %v1501, %v1792
        %v1886 = vsub.f32 %v1502, %v1794
        %v1887 = vsub.f32 %v1503, %v1796
        %v1888 = vsub.f32 %v1504, %v1798
        %v1889 = vsub.f32 %v1505, %v1800
        %v1890 = vsub.f32 %v1506, %v1802
        %v1891 = vsub.f32 %v1507, %v1804
        %v1892 = vsub.f32 %v1508, %v1806
        %v1893 = vsub.f32 %v1509, %v1808
        %v1894 = vsub.f32 %v1510, %v1810
        %v1895 = vsub.f32 %v1511, %v1812
        %v1896 = vsub.f32 %v1512, %v1814
        %v1897 = vsub.f32 %v1513, %v1816
        %v1898 = vsub.f32 %v1514, %v1818
        %v1899 = vsub.f32 %v1515, %v1820
        %v1900 = vsub.f32 %v1516, %v1822
        %v1901 = vsub.f32 %v1517, %v1824
        %v1902 = vsub.f32 %v1518, %v1826
        %v1903 = vsub.f32 %v1519, %v1828
        %v1904 = vsub.f32 %v1520, %v1830
        %v1905 = vsub.f32 %v1521, %v1832
        %v1906 = vsub.f32 %v1522, %v1834
        %v1907 = vsub.f32 %v1523, %v1836
        %v1908 = vsub.f32 %v1524, %v1838
        %v1909 = vsub.f32 %v1525, %v1840
        %v1910 = vsub.f32 %v1526, %v1842
        %v1911 = vsub.f32 %v1527, %v1844
        %v1912 = vsub.f32 %v1528, %v1846
        %v1913 = vsub.f32 %v1529, %v1848
        %v1914 = vsub.f32 %v1530, %v1850
        %v1915 = vsub.f32 %v1531, %v1852
        %v1916 = vsub.f32 %v1532, %v1854
        %v1917 = vsub.f32 %v1533, %v1856
        %v1918 = vsub.f32 %v1534, %v1858
        %v1919 = vsub.f32 %v1535, %v1860
        %v1920 = vsub.f32 %v1536, %v1862
        %v1921 = vsub.f32 %v1537, %v1864
        %v1922 = vsub.f32 %v1538, %v1866
        %v1923 = vsub.f32 %v1539, %v1868
        %v1924 = vsub.f32 %v1540, %v1870
        %v1925 = vsub.f32 %v1541, %v1872
        %v1926 = vsub.f32 %v1542, %v1874
        %v1927 = vsub.f32 %v1543, %v1876
        %v1928 = vsub.f32 %v1544, %v1878
        %v1929 = vsub.f32 %v1545, %v1880
        %v1930 = vsub.f32 %v1546, %v1882
        %v1931 = vsel %vm1259, -0.125, -0.375
        %v1932 = vsel %vm1260, -0.125, -0.375
        %v1933 = vsel %vm1261, -0.125, -0.375
        %v1934 = vsel %vm1262, -0.125, -0.375
        %v1935 = vsel %vm1263, -0.125, -0.375
        %v1936 = vsel %vm1264, -0.125, -0.375
        %v1937 = vsel %vm1265, -0.125, -0.375
        %v1938 = vsel %vm1266, -0.125, -0.375
        %v1939 = vsel %vm1267, -0.125, -0.375
        %v1940 = vsel %vm1268, -0.125, -0.375
        %v1941 = vsel %vm1269, -0.125, -0.375
        %v1942 = vsel %vm1270, -0.125, -0.375
        %v1943 = vsel %vm1271, -0.125, -0.375
        %v1944 = vsel %vm1272, -0.125, -0.375
        %v1945 = vsel %vm1273, -0.125, -0.375
        %v1946 = vsel %vm1274, -0.125, -0.375
        %v1947 = vsel %vm1275, -0.125, -0.375
        %v1948 = vsel %vm1276, -0.125, -0.375
        %v1949 = vsel %vm1277, -0.125, -0.375
        %v1950 = vsel %vm1278, -0.125, -0.375
        %v1951 = vsel %vm1279, -0.125, -0.375
        %v1952 = vsel %vm1280, -0.125, -0.375
        %v1953 = vsel %vm1281, -0.125, -0.375
        %v1954 = vsel %vm1282, -0.125, -0.375
        %v1955 = vsel %vm1283, -0.125, -0.375
        %v1956 = vsel %vm1284, -0.125, -0.375
        %v1957 = vsel %vm1285, -0.125, -0.375
        %v1958 = vsel %vm1286, -0.125, -0.375
        %v1959 = vsel %vm1287, -0.125, -0.375
        %v1960 = vsel %vm1288, -0.125, -0.375
        %v1961 = vsel %vm1289, -0.125, -0.375
        %v1962 = vsel %vm1290, -0.125, -0.375
        %v1963 = vsel %vm1291, -0.125, -0.375
        %v1964 = vsel %vm1292, -0.125, -0.375
        %v1965 = vsel %vm1293, -0.125, -0.375
        %v1966 = vsel %vm1294, -0.125, -0.375
        %v1967 = vsel %vm1295, -0.125, -0.375
        %v1968 = vsel %vm1296, -0.125, -0.375
        %v1969 = vsel %vm1297, -0.125, -0.375
        %v1970 = vsel %vm1298, -0.125, -0.375
        %v1971 = vsel %vm1299, -0.125, -0.375
        %v1972 = vsel %vm1300, -0.125, -0.375
        %v1973 = vsel %vm1301, -0.125, -0.375
        %v1974 = vsel %vm1302, -0.125, -0.375
        %v1975 = vsel %vm1303, -0.125, -0.375
        %v1976 = vsel %vm1304, -0.125, -0.375
        %v1977 = vsel %vm1305, -0.125, -0.375
        %v1978 = vsel %vm1306, -0.125, -0.375
        %v1979 = vmul.f32 %v1931, %v1883
        %v1980 = vmul.f32 %v1932, %v1884
        %v1981 = vmul.f32 %v1933, %v1885
        %v1982 = vmul.f32 %v1934, %v1886
        %v1983 = vmul.f32 %v1935, %v1887
        %v1984 = vmul.f32 %v1936, %v1888
        %v1985 = vmul.f32 %v1937, %v1889
        %v1986 = vmul.f32 %v1938, %v1890
        %v1987 = vmul.f32 %v1939, %v1891
        %v1988 = vmul.f32 %v1940, %v1892
        %v1989 = vmul.f32 %v1941, %v1893
        %v1990 = vmul.f32 %v1942, %v1894
        %v1991 = vmul.f32 %v1943, %v1895
        %v1992 = vmul.f32 %v1944, %v1896
        %v1993 = vmul.f32 %v1945, %v1897
        %v1994 = vmul.f32 %v1946, %v1898
        %v1995 = vmul.f32 %v1947, %v1899
        %v1996 = vmul.f32 %v1948, %v1900
        %v1997 = vmul.f32 %v1949, %v1901
        %v1998 = vmul.f32 %v1950, %v1902
        %v1999 = vmul.f32 %v1951, %v1903
        %v2000 = vmul.f32 %v1952, %v1904
        %v2001 = vmul.f32 %v1953, %v1905
        %v2002 = vmul.f32 %v1954, %v1906
        %v2003 = vmul.f32 %v1955, %v1907
        %v2004 = vmul.f32 %v1956, %v1908
        %v2005 = vmul.f32 %v1957, %v1909
        %v2006 = vmul.f32 %v1958, %v1910
        %v2007 = vmul.f32 %v1959, %v1911
        %v2008 = vmul.f32 %v1960, %v1912
        %v2009 = vmul.f32 %v1961, %v1913
        %v2010 = vmul.f32 %v1962, %v1914
        %v2011 = vmul.f32 %v1963, %v1915
        %v2012 = vmul.f32 %v1964, %v1916
        %v2013 = vmul.f32 %v1965, %v1917
        %v2014 = vmul.f32 %v1966, %v1918
        %v2015 = vmul.f32 %v1967, %v1919
        %v2016 = vmul.f32 %v1968, %v1920
        %v2017 = vmul.f32 %v1969, %v1921
        %v2018 = vmul.f32 %v1970, %v1922
        %v2019 = vmul.f32 %v1971, %v1923
        %v2020 = vmul.f32 %v1972, %v1924
        %v2021 = vmul.f32 %v1973, %v1925
        %v2022 = vmul.f32 %v1974, %v1926
        %v2023 = vmul.f32 %v1975, %v1927
        %v2024 = vmul.f32 %v1976, %v1928
        %v2025 = vmul.f32 %v1977, %v1929
        %v2026 = vmul.f32 %v1978, %v1930
        %v2027 = vsel %vm831, 1, 0
        %v2028 = vsel %vm832, 1, 0
        %v2029 = vlaneseq
        %v2030 = vshrl.u32 %v2029, 7
        %v2031 = vsub.s32 0, %v2030
        %v2032 = vrot.slane %v2027, %v2031
        %v2033 = vlaneseq
        %v2034 = vshrl.u32 %v2033, 7
        %v2035 = vsub.s32 1, %v2034
        %v2036 = vrot.slane %v2027, %v2035
        %v2037 = vlaneseq
        %v2038 = vshrl.u32 %v2037, 7
        %v2039 = vsub.s32 2, %v2038
        %v2040 = vrot.slane %v2027, %v2039
        %v2041 = vlaneseq
        %v2042 = vshrl.u32 %v2041, 7
        %v2043 = vsub.s32 3, %v2042
        %v2044 = vrot.slane %v2027, %v2043
        %v2045 = vlaneseq
        %v2046 = vshrl.u32 %v2045, 7
        %v2047 = vsub.s32 4, %v2046
        %v2048 = vrot.slane %v2027, %v2047
        %v2049 = vlaneseq
        %v2050 = vshrl.u32 %v2049, 7
        %v2051 = vsub.s32 5, %v2050
        %v2052 = vrot.slane %v2027, %v2051
        %v2053 = vlaneseq
        %v2054 = vshrl.u32 %v2053, 7
        %v2055 = vsub.s32 6, %v2054
        %v2056 = vrot.slane %v2027, %v2055
        %v2057 = vlaneseq
        %v2058 = vshrl.u32 %v2057, 7
        %v2059 = vsub.s32 7, %v2058
        %v2060 = vrot.slane %v2027, %v2059
        %v2061 = vlaneseq
        %v2062 = vshrl.u32 %v2061, 7
        %v2063 = vsub.s32 0, %v2062
        %v2064 = vrot.slane %v2028, %v2063
        %v2065 = vlaneseq
        %v2066 = vshrl.u32 %v2065, 7
        %v2067 = vsub.s32 1, %v2066
        %v2068 = vrot.slane %v2028, %v2067
        %v2069 = vlaneseq
        %v2070 = vshrl.u32 %v2069, 7
        %v2071 = vsub.s32 2, %v2070
        %v2072 = vrot.slane %v2028, %v2071
        %v2073 = vlaneseq
        %v2074 = vshrl.u32 %v2073, 7
        %v2075 = vsub.s32 3, %v2074
        %v2076 = vrot.slane %v2028, %v2075
        %v2077 = vlaneseq
        %v2078 = vshrl.u32 %v2077, 7
        %v2079 = vsub.s32 4, %v2078
        %v2080 = vrot.slane %v2028, %v2079
        %v2081 = vlaneseq
        %v2082 = vshrl.u32 %v2081, 7
        %v2083 = vsub.s32 5, %v2082
        %v2084 = vrot.slane %v2028, %v2083
        %v2085 = vlaneseq
        %v2086 = vshrl.u32 %v2085, 7
        %v2087 = vsub.s32 6, %v2086
        %v2088 = vrot.slane %v2028, %v2087
        %v2089 = vlaneseq
        %v2090 = vshrl.u32 %v2089, 7
        %v2091 = vsub.s32 7, %v2090
        %v2092 = vrot.slane %v2028, %v2091
        %vm2093 = vcmp.eq.s32.totalorder %v2032, 1
        %vm2094 = vcmp.eq.s32.totalorder %v2036, 1
        %vm2095 = vcmp.eq.s32.totalorder %v2040, 1
        %vm2096 = vcmp.eq.s32.totalorder %v2044, 1
        %vm2097 = vcmp.eq.s32.totalorder %v2048, 1
        %vm2098 = vcmp.eq.s32.totalorder %v2052, 1
        %vm2099 = vcmp.eq.s32.totalorder %v2056, 1
        %vm2100 = vcmp.eq.s32.totalorder %v2060, 1
        %vm2101 = vcmp.eq.s32.totalorder %v2064, 1
        %vm2102 = vcmp.eq.s32.totalorder %v2068, 1
        %vm2103 = vcmp.eq.s32.totalorder %v2072, 1
        %vm2104 = vcmp.eq.s32.totalorder %v2076, 1
        %vm2105 = vcmp.eq.s32.totalorder %v2080, 1
        %vm2106 = vcmp.eq.s32.totalorder %v2084, 1
        %vm2107 = vcmp.eq.s32.totalorder %v2088, 1
        %vm2108 = vcmp.eq.s32.totalorder %v2092, 1
        %v2109 = vsel %vm2093, %v1979, 0.0
        %v2110 = vsel %vm2094, %v1980, 0.0
        %v2111 = vsel %vm2095, %v1981, 0.0
        %v2112 = vsel %vm2096, %v1982, 0.0
        %v2113 = vsel %vm2097, %v1983, 0.0
        %v2114 = vsel %vm2098, %v1984, 0.0
        %v2115 = vsel %vm2099, %v1985, 0.0
        %v2116 = vsel %vm2100, %v1986, 0.0
        %v2117 = vsel %vm2101, %v1987, 0.0
        %v2118 = vsel %vm2102, %v1988, 0.0
        %v2119 = vsel %vm2103, %v1989, 0.0
        %v2120 = vsel %vm2104, %v1990, 0.0
        %v2121 = vsel %vm2105, %v1991, 0.0
        %v2122 = vsel %vm2106, %v1992, 0.0
        %v2123 = vsel %vm2107, %v1993, 0.0
        %v2124 = vsel %vm2108, %v1994, 0.0
        %v2125 = vsel %vm2093, %v1995, 0.0
        %v2126 = vsel %vm2094, %v1996, 0.0
        %v2127 = vsel %vm2095, %v1997, 0.0
        %v2128 = vsel %vm2096, %v1998, 0.0
        %v2129 = vsel %vm2097, %v1999, 0.0
        %v2130 = vsel %vm2098, %v2000, 0.0
        %v2131 = vsel %vm2099, %v2001, 0.0
        %v2132 = vsel %vm2100, %v2002, 0.0
        %v2133 = vsel %vm2101, %v2003, 0.0
        %v2134 = vsel %vm2102, %v2004, 0.0
        %v2135 = vsel %vm2103, %v2005, 0.0
        %v2136 = vsel %vm2104, %v2006, 0.0
        %v2137 = vsel %vm2105, %v2007, 0.0
        %v2138 = vsel %vm2106, %v2008, 0.0
        %v2139 = vsel %vm2107, %v2009, 0.0
        %v2140 = vsel %vm2108, %v2010, 0.0
        %v2141 = vsel %vm2093, %v2011, 0.0
        %v2142 = vsel %vm2094, %v2012, 0.0
        %v2143 = vsel %vm2095, %v2013, 0.0
        %v2144 = vsel %vm2096, %v2014, 0.0
        %v2145 = vsel %vm2097, %v2015, 0.0
        %v2146 = vsel %vm2098, %v2016, 0.0
        %v2147 = vsel %vm2099, %v2017, 0.0
        %v2148 = vsel %vm2100, %v2018, 0.0
        %v2149 = vsel %vm2101, %v2019, 0.0
        %v2150 = vsel %vm2102, %v2020, 0.0
        %v2151 = vsel %vm2103, %v2021, 0.0
        %v2152 = vsel %vm2104, %v2022, 0.0
        %v2153 = vsel %vm2105, %v2023, 0.0
        %v2154 = vsel %vm2106, %v2024, 0.0
        %v2155 = vsel %vm2107, %v2025, 0.0
        %v2156 = vsel %vm2108, %v2026, 0.0
        %v2157 = vadd.f32 %v2109, %v2125
        %v2158 = vsel %vm1027, %v2141, 0.0
        %v2159 = vadd.f32 %v2157, %v2158
        %v2160 = vrot.slane %v2159, 4
        %v2161 = vadd.f32 %v2159, %v2160
        %v2162 = vrot.slane %v2161, 2
        %v2163 = vadd.f32 %v2161, %v2162
        %v2164 = vrot.slane %v2163, 1
        %v2165 = vadd.f32 %v2163, %v2164
        %v2166 = vadd.f32 %v2110, %v2126
        %v2167 = vsel %vm1027, %v2142, 0.0
        %v2168 = vadd.f32 %v2166, %v2167
        %v2169 = vrot.slane %v2168, 4
        %v2170 = vadd.f32 %v2168, %v2169
        %v2171 = vrot.slane %v2170, 2
        %v2172 = vadd.f32 %v2170, %v2171
        %v2173 = vrot.slane %v2172, 1
        %v2174 = vadd.f32 %v2172, %v2173
        %v2175 = vadd.f32 %v2111, %v2127
        %v2176 = vsel %vm1027, %v2143, 0.0
        %v2177 = vadd.f32 %v2175, %v2176
        %v2178 = vrot.slane %v2177, 4
        %v2179 = vadd.f32 %v2177, %v2178
        %v2180 = vrot.slane %v2179, 2
        %v2181 = vadd.f32 %v2179, %v2180
        %v2182 = vrot.slane %v2181, 1
        %v2183 = vadd.f32 %v2181, %v2182
        %v2184 = vadd.f32 %v2112, %v2128
        %v2185 = vsel %vm1027, %v2144, 0.0
        %v2186 = vadd.f32 %v2184, %v2185
        %v2187 = vrot.slane %v2186, 4
        %v2188 = vadd.f32 %v2186, %v2187
        %v2189 = vrot.slane %v2188, 2
        %v2190 = vadd.f32 %v2188, %v2189
        %v2191 = vrot.slane %v2190, 1
        %v2192 = vadd.f32 %v2190, %v2191
        %v2193 = vadd.f32 %v2113, %v2129
        %v2194 = vsel %vm1027, %v2145, 0.0
        %v2195 = vadd.f32 %v2193, %v2194
        %v2196 = vrot.slane %v2195, 4
        %v2197 = vadd.f32 %v2195, %v2196
        %v2198 = vrot.slane %v2197, 2
        %v2199 = vadd.f32 %v2197, %v2198
        %v2200 = vrot.slane %v2199, 1
        %v2201 = vadd.f32 %v2199, %v2200
        %v2202 = vadd.f32 %v2114, %v2130
        %v2203 = vsel %vm1027, %v2146, 0.0
        %v2204 = vadd.f32 %v2202, %v2203
        %v2205 = vrot.slane %v2204, 4
        %v2206 = vadd.f32 %v2204, %v2205
        %v2207 = vrot.slane %v2206, 2
        %v2208 = vadd.f32 %v2206, %v2207
        %v2209 = vrot.slane %v2208, 1
        %v2210 = vadd.f32 %v2208, %v2209
        %v2211 = vadd.f32 %v2115, %v2131
        %v2212 = vsel %vm1027, %v2147, 0.0
        %v2213 = vadd.f32 %v2211, %v2212
        %v2214 = vrot.slane %v2213, 4
        %v2215 = vadd.f32 %v2213, %v2214
        %v2216 = vrot.slane %v2215, 2
        %v2217 = vadd.f32 %v2215, %v2216
        %v2218 = vrot.slane %v2217, 1
        %v2219 = vadd.f32 %v2217, %v2218
        %v2220 = vadd.f32 %v2116, %v2132
        %v2221 = vsel %vm1027, %v2148, 0.0
        %v2222 = vadd.f32 %v2220, %v2221
        %v2223 = vrot.slane %v2222, 4
        %v2224 = vadd.f32 %v2222, %v2223
        %v2225 = vrot.slane %v2224, 2
        %v2226 = vadd.f32 %v2224, %v2225
        %v2227 = vrot.slane %v2226, 1
        %v2228 = vadd.f32 %v2226, %v2227
        %v2229 = vadd.f32 %v2117, %v2133
        %v2230 = vsel %vm1027, %v2149, 0.0
        %v2231 = vadd.f32 %v2229, %v2230
        %v2232 = vrot.slane %v2231, 4
        %v2233 = vadd.f32 %v2231, %v2232
        %v2234 = vrot.slane %v2233, 2
        %v2235 = vadd.f32 %v2233, %v2234
        %v2236 = vrot.slane %v2235, 1
        %v2237 = vadd.f32 %v2235, %v2236
        %v2238 = vadd.f32 %v2118, %v2134
        %v2239 = vsel %vm1027, %v2150, 0.0
        %v2240 = vadd.f32 %v2238, %v2239
        %v2241 = vrot.slane %v2240, 4
        %v2242 = vadd.f32 %v2240, %v2241
        %v2243 = vrot.slane %v2242, 2
        %v2244 = vadd.f32 %v2242, %v2243
        %v2245 = vrot.slane %v2244, 1
        %v2246 = vadd.f32 %v2244, %v2245
        %v2247 = vadd.f32 %v2119, %v2135
        %v2248 = vsel %vm1027, %v2151, 0.0
        %v2249 = vadd.f32 %v2247, %v2248
        %v2250 = vrot.slane %v2249, 4
        %v2251 = vadd.f32 %v2249, %v2250
        %v2252 = vrot.slane %v2251, 2
        %v2253 = vadd.f32 %v2251, %v2252
        %v2254 = vrot.slane %v2253, 1
        %v2255 = vadd.f32 %v2253, %v2254
        %v2256 = vadd.f32 %v2120, %v2136
        %v2257 = vsel %vm1027, %v2152, 0.0
        %v2258 = vadd.f32 %v2256, %v2257
        %v2259 = vrot.slane %v2258, 4
        %v2260 = vadd.f32 %v2258, %v2259
        %v2261 = vrot.slane %v2260, 2
        %v2262 = vadd.f32 %v2260, %v2261
        %v2263 = vrot.slane %v2262, 1
        %v2264 = vadd.f32 %v2262, %v2263
        %v2265 = vadd.f32 %v2121, %v2137
        %v2266 = vsel %vm1027, %v2153, 0.0
        %v2267 = vadd.f32 %v2265, %v2266
        %v2268 = vrot.slane %v2267, 4
        %v2269 = vadd.f32 %v2267, %v2268
        %v2270 = vrot.slane %v2269, 2
        %v2271 = vadd.f32 %v2269, %v2270
        %v2272 = vrot.slane %v2271, 1
        %v2273 = vadd.f32 %v2271, %v2272
        %v2274 = vadd.f32 %v2122, %v2138
        %v2275 = vsel %vm1027, %v2154, 0.0
        %v2276 = vadd.f32 %v2274, %v2275
        %v2277 = vrot.slane %v2276, 4
        %v2278 = vadd.f32 %v2276, %v2277
        %v2279 = vrot.slane %v2278, 2
        %v2280 = vadd.f32 %v2278, %v2279
        %v2281 = vrot.slane %v2280, 1
        %v2282 = vadd.f32 %v2280, %v2281
        %v2283 = vadd.f32 %v2123, %v2139
        %v2284 = vsel %vm1027, %v2155, 0.0
        %v2285 = vadd.f32 %v2283, %v2284
        %v2286 = vrot.slane %v2285, 4
        %v2287 = vadd.f32 %v2285, %v2286
        %v2288 = vrot.slane %v2287, 2
        %v2289 = vadd.f32 %v2287, %v2288
        %v2290 = vrot.slane %v2289, 1
        %v2291 = vadd.f32 %v2289, %v2290
        %v2292 = vadd.f32 %v2124, %v2140
        %v2293 = vsel %vm1027, %v2156, 0.0
        %v2294 = vadd.f32 %v2292, %v2293
        %v2295 = vrot.slane %v2294, 4
        %v2296 = vadd.f32 %v2294, %v2295
        %v2297 = vrot.slane %v2296, 2
        %v2298 = vadd.f32 %v2296, %v2297
        %v2299 = vrot.slane %v2298, 1
        %v2300 = vadd.f32 %v2298, %v2299
        %v2301 = vld [vmem:[#allocation2] sm:$0xff]
        %v2302 = vld [vmem:[#allocation2 + $0x8] sm:$0xff]
        %v2303 = vadd.f32 %v1034, %v2165
        %v2304 = vadd.f32 %v1041, %v2174
        %v2305 = vadd.f32 %v1048, %v2183
        %v2306 = vadd.f32 %v1055, %v2192
        %v2307 = vadd.f32 %v1062, %v2201
        %v2308 = vadd.f32 %v1069, %v2210
        %v2309 = vadd.f32 %v1076, %v2219
        %v2310 = vadd.f32 %v1083, %v2228
        %v2311 = vadd.f32 %v1090, %v2237
        %v2312 = vadd.f32 %v1097, %v2246
        %v2313 = vadd.f32 %v1104, %v2255
        %v2314 = vadd.f32 %v1111, %v2264
        %v2315 = vadd.f32 %v1118, %v2273
        %v2316 = vadd.f32 %v1125, %v2282
        %v2317 = vadd.f32 %v1132, %v2291
        %v2318 = vadd.f32 %v1139, %v2300
        %v2335 = vcombine.low %v2303, %v2304
        %v2336 = vcombine.low %v2305, %v2306
        %v2337 = vcombine.low %v2307, %v2308
        %v2338 = vcombine.low %v2309, %v2310
        %v2340 = vunpack.c.l.s4 1966171168
        %v2341 = vunpack.c.0.s8 %v2340
        %v2342 = vlaneseq
        %v2343 = vshrl.u32 %v2342, 7
        %v2344 = vsub.s32 %v2341, %v2343
        %v2345 = vrot.slane %v2335, %v2344
        %v2347 = vunpack.c.l.s4 1966171168
        %v2348 = vunpack.c.0.s8 %v2347
        %v2349 = vlaneseq
        %v2350 = vshrl.u32 %v2349, 7
        %v2351 = vsub.s32 %v2348, %v2350
        %v2352 = vrot.slane %v2336, %v2351
        %v2354 = vunpack.c.l.s4 1966171168
        %v2355 = vunpack.c.0.s8 %v2354
        %v2356 = vlaneseq
        %v2357 = vshrl.u32 %v2356, 7
        %v2358 = vsub.s32 %v2355, %v2357
        %v2359 = vrot.slane %v2337, %v2358
        %v2361 = vunpack.c.l.s4 1966171168
        %v2362 = vunpack.c.0.s8 %v2361
        %v2363 = vlaneseq
        %v2364 = vshrl.u32 %v2363, 7
        %v2365 = vsub.s32 %v2362, %v2364
        %v2366 = vrot.slane %v2338, %v2365
        %v2367 = vcombine.low %v2345, %v2352
        %v2368 = vcombine.low %v2359, %v2366
        %v2370 = vunpack.c.l.s4 1966171168
        %v2371 = vunpack.c.0.s8 %v2370
        %v2372 = vlaneseq
        %v2373 = vshrl.u32 %v2372, 7
        %v2374 = vsub.s32 %v2371, %v2373
        %v2375 = vrot.slane %v2367, %v2374
        %v2377 = vunpack.c.l.s4 1966171168
        %v2378 = vunpack.c.0.s8 %v2377
        %v2379 = vlaneseq
        %v2380 = vshrl.u32 %v2379, 7
        %v2381 = vsub.s32 %v2378, %v2380
        %v2382 = vrot.slane %v2368, %v2381
        %v2383 = vcombine.low %v2375, %v2382
        %v2384 = vcombine.low %v2311, %v2312
        %v2385 = vcombine.low %v2313, %v2314
        %v2386 = vcombine.low %v2315, %v2316
        %v2387 = vcombine.low %v2317, %v2318
        %v2389 = vunpack.c.l.s4 1966171168
        %v2390 = vunpack.c.0.s8 %v2389
        %v2391 = vlaneseq
        %v2392 = vshrl.u32 %v2391, 7
        %v2393 = vsub.s32 %v2390, %v2392
        %v2394 = vrot.slane %v2384, %v2393
        %v2396 = vunpack.c.l.s4 1966171168
        %v2397 = vunpack.c.0.s8 %v2396
        %v2398 = vlaneseq
        %v2399 = vshrl.u32 %v2398, 7
        %v2400 = vsub.s32 %v2397, %v2399
        %v2401 = vrot.slane %v2385, %v2400
        %v2403 = vunpack.c.l.s4 1966171168
        %v2404 = vunpack.c.0.s8 %v2403
        %v2405 = vlaneseq
        %v2406 = vshrl.u32 %v2405, 7
        %v2407 = vsub.s32 %v2404, %v2406
        %v2408 = vrot.slane %v2386, %v2407
        %v2410 = vunpack.c.l.s4 1966171168
        %v2411 = vunpack.c.0.s8 %v2410
        %v2412 = vlaneseq
        %v2413 = vshrl.u32 %v2412, 7
        %v2414 = vsub.s32 %v2411, %v2413
        %v2415 = vrot.slane %v2387, %v2414
        %v2416 = vcombine.low %v2394, %v2401
        %v2417 = vcombine.low %v2408, %v2415
        %v2419 = vunpack.c.l.s4 1966171168
        %v2420 = vunpack.c.0.s8 %v2419
        %v2421 = vlaneseq
        %v2422 = vshrl.u32 %v2421, 7
        %v2423 = vsub.s32 %v2420, %v2422
        %v2424 = vrot.slane %v2416, %v2423
        %v2426 = vunpack.c.l.s4 1966171168
        %v2427 = vunpack.c.0.s8 %v2426
        %v2428 = vlaneseq
        %v2429 = vshrl.u32 %v2428, 7
        %v2430 = vsub.s32 %v2427, %v2429
        %v2431 = vrot.slane %v2417, %v2430
        %v2432 = vcombine.low %v2424, %v2431
        %v2435 = vadd.f32 %v2301, %v2383
        %v2436 = vadd.f32 %v2302, %v2432
        %2437 = vst [vmem:[#allocation2] sm:$0xff] %v2435
        %2438 = vst [vmem:[#allocation2 + $0x8] sm:$0xff] %v2436
        %v2439 = vld [vmem:[#allocation3] sm:$0xff]
        %v2440 = vld [vmem:[#allocation3 + $0x8] sm:$0xff]
        %v2441 = vcvt.s32.f32 %v905
        %v2442 = vcvt.s32.f32 %v906
        %v2443 = vadd.f32 %v2439, %v2441
        %v2444 = vadd.f32 %v2440, %v2442
        %2445 = vst [vmem:[#allocation3] sm:$0xff] %v2443
        %2446 = vst [vmem:[#allocation3 + $0x8] sm:$0xff] %v2444
      $region44: #{focal_loss.2} parent=35 // pred_fallthru
        _
      // Predicated region
      $region45: #{focal_loss.2} parent=35 // pred_check
        %p2447 = pneg %p643
      $region46: #{focal_loss.2} parent=35 // pred_check_branch
        %2449 = sbr.rel (%p2447) target = $region48
      $region47: #{focal_loss.2} parent=35 // pred_region
        %v2450 = vld [vmem:[#allocation2] sm:$0xff]
        %v2451 = vld [vmem:[#allocation2 + $0x8] sm:$0xff]
        %v2454 = vlaneseq
        %v2455 = vshrl.u32 %v2454, 7
        %v2456 = vsub.s32 0, %v2455
        %v2457 = vrot.slane %v2450, %v2456
        %v2458 = vlaneseq
        %v2459 = vshrl.u32 %v2458, 7
        %v2460 = vsub.s32 1, %v2459
        %v2461 = vrot.slane %v2450, %v2460
        %v2462 = vlaneseq
        %v2463 = vshrl.u32 %v2462, 7
        %v2464 = vsub.s32 2, %v2463
        %v2465 = vrot.slane %v2450, %v2464
        %v2466 = vlaneseq
        %v2467 = vshrl.u32 %v2466, 7
        %v2468 = vsub.s32 3, %v2467
        %v2469 = vrot.slane %v2450, %v2468
        %v2470 = vlaneseq
        %v2471 = vshrl.u32 %v2470, 7
        %v2472 = vsub.s32 4, %v2471
        %v2473 = vrot.slane %v2450, %v2472
        %v2474 = vlaneseq
        %v2475 = vshrl.u32 %v2474, 7
        %v2476 = vsub.s32 5, %v2475
        %v2477 = vrot.slane %v2450, %v2476
        %v2478 = vlaneseq
        %v2479 = vshrl.u32 %v2478, 7
        %v2480 = vsub.s32 6, %v2479
        %v2481 = vrot.slane %v2450, %v2480
        %v2482 = vlaneseq
        %v2483 = vshrl.u32 %v2482, 7
        %v2484 = vsub.s32 7, %v2483
        %v2485 = vrot.slane %v2450, %v2484
        %v2486 = vlaneseq
        %v2487 = vshrl.u32 %v2486, 7
        %v2488 = vsub.s32 0, %v2487
        %v2489 = vrot.slane %v2451, %v2488
        %v2490 = vlaneseq
        %v2491 = vshrl.u32 %v2490, 7
        %v2492 = vsub.s32 1, %v2491
        %v2493 = vrot.slane %v2451, %v2492
        %v2494 = vlaneseq
        %v2495 = vshrl.u32 %v2494, 7
        %v2496 = vsub.s32 2, %v2495
        %v2497 = vrot.slane %v2451, %v2496
        %v2498 = vlaneseq
        %v2499 = vshrl.u32 %v2498, 7
        %v2500 = vsub.s32 3, %v2499
        %v2501 = vrot.slane %v2451, %v2500
        %v2502 = vlaneseq
        %v2503 = vshrl.u32 %v2502, 7
        %v2504 = vsub.s32 4, %v2503
        %v2505 = vrot.slane %v2451, %v2504
        %v2506 = vlaneseq
        %v2507 = vshrl.u32 %v2506, 7
        %v2508 = vsub.s32 5, %v2507
        %v2509 = vrot.slane %v2451, %v2508
        %v2510 = vlaneseq
        %v2511 = vshrl.u32 %v2510, 7
        %v2512 = vsub.s32 6, %v2511
        %v2513 = vrot.slane %v2451, %v2512
        %v2514 = vlaneseq
        %v2515 = vshrl.u32 %v2514, 7
        %v2516 = vsub.s32 7, %v2515
        %v2517 = vrot.slane %v2451, %v2516
        %vm2534 = vcmask 1040384
        %v2535 = vsel %vm2534, %v2457, 0.0
        %v2536 = vsel %vm2534, %v2461, 0.0
        %v2537 = vadd.f32 %v2535, %v2536
        %v2538 = vsel %vm2534, %v2465, 0.0
        %v2539 = vadd.f32 %v2537, %v2538
        %v2540 = vsel %vm2534, %v2469, 0.0
        %v2541 = vadd.f32 %v2539, %v2540
        %v2542 = vsel %vm2534, %v2473, 0.0
        %v2543 = vadd.f32 %v2541, %v2542
        %v2544 = vsel %vm2534, %v2477, 0.0
        %v2545 = vadd.f32 %v2543, %v2544
        %v2546 = vsel %vm2534, %v2481, 0.0
        %v2547 = vadd.f32 %v2545, %v2546
        %v2548 = vsel %vm2534, %v2485, 0.0
        %v2549 = vadd.f32 %v2547, %v2548
        %v2550 = vsel %vm2534, %v2489, 0.0
        %v2551 = vadd.f32 %v2549, %v2550
        %v2552 = vsel %vm2534, %v2493, 0.0
        %v2553 = vadd.f32 %v2551, %v2552
        %v2554 = vsel %vm2534, %v2497, 0.0
        %v2555 = vadd.f32 %v2553, %v2554
        %v2556 = vsel %vm2534, %v2501, 0.0
        %v2557 = vadd.f32 %v2555, %v2556
        %v2558 = vsel %vm2534, %v2505, 0.0
        %v2559 = vadd.f32 %v2557, %v2558
        %v2560 = vsel %vm2534, %v2509, 0.0
        %v2561 = vadd.f32 %v2559, %v2560
        %v2562 = vsel %vm2534, %v2513, 0.0
        %v2563 = vadd.f32 %v2561, %v2562
        %v2564 = vsel %vm2534, %v2517, 0.0
        %v2565 = vadd.f32 %v2563, %v2564
        %2566 = vadd.xlane.f32.xlu0 %v2565
        %v2567 = vpop.xlane.xlu0 %2566
        %v2568 = vld [vmem:[#allocation3] sm:$0xff]
        %v2569 = vld [vmem:[#allocation3 + $0x8] sm:$0xff]
        %v2572 = vlaneseq
        %v2573 = vshrl.u32 %v2572, 7
        %v2574 = vsub.s32 0, %v2573
        %v2575 = vrot.slane %v2568, %v2574
        %v2576 = vlaneseq
        %v2577 = vshrl.u32 %v2576, 7
        %v2578 = vsub.s32 1, %v2577
        %v2579 = vrot.slane %v2568, %v2578
        %v2580 = vlaneseq
        %v2581 = vshrl.u32 %v2580, 7
        %v2582 = vsub.s32 2, %v2581
        %v2583 = vrot.slane %v2568, %v2582
        %v2584 = vlaneseq
        %v2585 = vshrl.u32 %v2584, 7
        %v2586 = vsub.s32 3, %v2585
        %v2587 = vrot.slane %v2568, %v2586
        %v2588 = vlaneseq
        %v2589 = vshrl.u32 %v2588, 7
        %v2590 = vsub.s32 4, %v2589
        %v2591 = vrot.slane %v2568, %v2590
        %v2592 = vlaneseq
        %v2593 = vshrl.u32 %v2592, 7
        %v2594 = vsub.s32 5, %v2593
        %v2595 = vrot.slane %v2568, %v2594
        %v2596 = vlaneseq
        %v2597 = vshrl.u32 %v2596, 7
        %v2598 = vsub.s32 6, %v2597
        %v2599 = vrot.slane %v2568, %v2598
        %v2600 = vlaneseq
        %v2601 = vshrl.u32 %v2600, 7
        %v2602 = vsub.s32 7, %v2601
        %v2603 = vrot.slane %v2568, %v2602
        %v2604 = vlaneseq
        %v2605 = vshrl.u32 %v2604, 7
        %v2606 = vsub.s32 0, %v2605
        %v2607 = vrot.slane %v2569, %v2606
        %v2608 = vlaneseq
        %v2609 = vshrl.u32 %v2608, 7
        %v2610 = vsub.s32 1, %v2609
        %v2611 = vrot.slane %v2569, %v2610
        %v2612 = vlaneseq
        %v2613 = vshrl.u32 %v2612, 7
        %v2614 = vsub.s32 2, %v2613
        %v2615 = vrot.slane %v2569, %v2614
        %v2616 = vlaneseq
        %v2617 = vshrl.u32 %v2616, 7
        %v2618 = vsub.s32 3, %v2617
        %v2619 = vrot.slane %v2569, %v2618
        %v2620 = vlaneseq
        %v2621 = vshrl.u32 %v2620, 7
        %v2622 = vsub.s32 4, %v2621
        %v2623 = vrot.slane %v2569, %v2622
        %v2624 = vlaneseq
        %v2625 = vshrl.u32 %v2624, 7
        %v2626 = vsub.s32 5, %v2625
        %v2627 = vrot.slane %v2569, %v2626
        %v2628 = vlaneseq
        %v2629 = vshrl.u32 %v2628, 7
        %v2630 = vsub.s32 6, %v2629
        %v2631 = vrot.slane %v2569, %v2630
        %v2632 = vlaneseq
        %v2633 = vshrl.u32 %v2632, 7
        %v2634 = vsub.s32 7, %v2633
        %v2635 = vrot.slane %v2569, %v2634
        %v2652 = vsel %vm2534, %v2575, 0.0
        %v2653 = vsel %vm2534, %v2579, 0.0
        %v2654 = vadd.f32 %v2652, %v2653
        %v2655 = vsel %vm2534, %v2583, 0.0
        %v2656 = vadd.f32 %v2654, %v2655
        %v2657 = vsel %vm2534, %v2587, 0.0
        %v2658 = vadd.f32 %v2656, %v2657
        %v2659 = vsel %vm2534, %v2591, 0.0
        %v2660 = vadd.f32 %v2658, %v2659
        %v2661 = vsel %vm2534, %v2595, 0.0
        %v2662 = vadd.f32 %v2660, %v2661
        %v2663 = vsel %vm2534, %v2599, 0.0
        %v2664 = vadd.f32 %v2662, %v2663
        %v2665 = vsel %vm2534, %v2603, 0.0
        %v2666 = vadd.f32 %v2664, %v2665
        %v2667 = vsel %vm2534, %v2607, 0.0
        %v2668 = vadd.f32 %v2666, %v2667
        %v2669 = vsel %vm2534, %v2611, 0.0
        %v2670 = vadd.f32 %v2668, %v2669
        %v2671 = vsel %vm2534, %v2615, 0.0
        %v2672 = vadd.f32 %v2670, %v2671
        %v2673 = vsel %vm2534, %v2619, 0.0
        %v2674 = vadd.f32 %v2672, %v2673
        %v2675 = vsel %vm2534, %v2623, 0.0
        %v2676 = vadd.f32 %v2674, %v2675
        %v2677 = vsel %vm2534, %v2627, 0.0
        %v2678 = vadd.f32 %v2676, %v2677
        %v2679 = vsel %vm2534, %v2631, 0.0
        %v2680 = vadd.f32 %v2678, %v2679
        %v2681 = vsel %vm2534, %v2635, 0.0
        %v2682 = vadd.f32 %v2680, %v2681
        %2683 = vadd.xlane.f32.xlu0 %v2682
        %v2684 = vpop.xlane.xlu0 %2683
        %v2685 = vlaneseq
        %v2686 = vand.u32 %v2685, 127
        %vm2687 = vcmp.eq.s32.totalorder %v2686, 0
        %vm2688 = vcmp.eq.s32.totalorder %v2686, 1
        %v2689 = vlaneseq
        %v2690 = vshrl.u32 %v2689, 7
        %v2691 = vsub.s32 0, %v2690
        %v2692 = vrot.slane %v2684, %v2691
        %v2693 = vsel %vm2688, %v2692, 0.0
        %v2694 = vlaneseq
        %v2695 = vshrl.u32 %v2694, 7
        %v2696 = vsub.s32 0, %v2695
        %v2697 = vrot.slane %v2567, %v2696
        %v2698 = vsel %vm2687, %v2697, %v2693
        %2699 = vst [vmem:[%s356] sm:$0xff] %v2698
      $region48: #{focal_loss.2} parent=35 // pred_fallthru
        _
      %p2700 = scmp.lt.s32.totalorder %s19, 1
      %s2701 = scalar_select %p2700, %s19, 1
      %s2702 = smul.addr %s2701, 8
      %s2703 = scalar_lea.vmem %s4, %s2702
      // Predicated region
      $region49: #{focal_loss.2} parent=35 // pred_check
        %p2704 = pneg %p173
      $region50: #{focal_loss.2} parent=35 // pred_check_branch
        %2706 = sbr.rel (%p2704) target = $region52
      $region51: #{focal_loss.2} parent=35 // pred_region
        _
      $region52: #{focal_loss.2} parent=35 // pred_fallthru
        _
    $region36: #{focal_loss.2} parent=5 // pred_fallthru
      _
    %p2707 = scmp.le.s32.totalorder 2, %s10
    // Predicated region
    $region53: #{focal_loss.2} parent=5 // pred_check
      %p2708 = pneg %p2707
    $region54: #{focal_loss.2} parent=5 // pred_check_branch
      %2710 = sbr.rel (%p2708) target = $region56
    $region55: #{focal_loss.2} parent=5 // pred_region
      %s2711 = ssub.s32 %s10, 2
      // Predicated region
      $region57: #{focal_loss.2} parent=55 // pred_check
        %p2712 = pneg %p179
      $region58: #{focal_loss.2} parent=55 // pred_check_branch
        %2714 = sbr.rel (%p2712) target = $region60
      $region59: #{focal_loss.2} parent=55 // pred_region
        %p2715 = scmp.lt.s32.totalorder %s21, 1
        %s2716 = scalar_select %p2715, %s21, 1
        %s2717 = smul.addr %s2716, 8
        %s2718 = scalar_lea.vmem %s4, %s2717
      $region60: #{focal_loss.2} parent=55 // pred_fallthru
        _
    $region56: #{focal_loss.2} parent=5 // pred_fallthru
      _
  $region6: #{focal_loss.2} parent=0 // loop_footer
    %s14 = sadd.s32 1, %s10
  $region7: #{focal_loss.2} parent=0 // loop_footer_branch
    %9 = sbr.rel target = $region3
  $region8: #{focal_loss.2} parent=0 // loop_exit
    _

</llo_original>
